<compile_context>
chip_gen: v7x
topology: tpu7x:2x2x1
jax: 0.10.0
libtpu: 0.0.40
codegen_flags: <defaults>
</compile_context>

<pallas_src>
import functools

import jax
import jax.numpy as jnp
from jax import lax
from jax.experimental import pallas as pl
from jax.experimental.pallas import tpu as pltpu


# ----------------------------------------------------------------------------------
# Shared helpers (used by both wrapper and kernel so orderings always match)
# ----------------------------------------------------------------------------------
def _round_up(x, m):
    return ((x + m - 1) // m) * m


def _mask_offsets(dilation):
    """Deterministic list of distinct non-center (oy, ox) offsets needed."""
    offs = []
    for d in sorted(set(tuple(dilation)) | {1}):       # {1} for the post 3x3 conv
        for ky in range(3):
            for kx in range(3):
                if ky == 1 and kx == 1:
                    continue
                o = ((ky - 1) * d, (kx - 1) * d)
                if o not in offs:
                    offs.append(o)
    return offs


def _build_masks(offsets, H, W, B):
    """(n_off, B*H*W) f32 validity masks, tiled per image in the lane slab."""
    yy = jnp.arange(H).reshape(H, 1)
    xx = jnp.arange(W).reshape(1, W)
    rows = []
    for (oy, ox) in offsets:
        ok = (yy + oy >= 0) & (yy + oy < H) & (xx + ox >= 0) & (xx + ox < W)
        rows.append(ok.reshape(1, H * W))
    m = jnp.concatenate(rows, axis=0).astype(jnp.float32)
    return jnp.tile(m, (1, B))


def _pick_images_per_step(N, HW, target_lanes=1024):
    """Largest divisor B of N with B*HW <= target_lanes; keep >=2 grid steps when
    that still leaves a reasonably wide lane slab (v7x two-TensorCore sharding)."""
    divs = [d for d in range(1, N + 1) if N % d == 0]
    cand = [d for d in divs if d * HW <= target_lanes] or [divs[0]]
    B = cand[-1]
    wide = [d for d in cand if N // d >= 2 and d * HW >= 512]
    if N // B < 2 and wide:
        B = wide[-1]
    if N // B > 1 and (B * HW) % 128 != 0:   # lane blocks must be 128-aligned
        B = N                                # (full-slab block is always legal)
    return B


# ----------------------------------------------------------------------------------
# Pallas kernel
# ----------------------------------------------------------------------------------
def mdc_block_kernel(x_ref, mask_ref, wpre_ref, bpre_ref, w1_ref, b1_ref,
                     w2_ref, t2_ref, out_ref, *, dilation, img_w):
    LB = x_ref.shape[-1]                                # lanes in this block (B*H*W)
    offs = _mask_offsets(dilation)
    off_index = {o: i for i, o in enumerate(offs)}

    def shifted(v, oy, ox):
        # v[c, p] -> v[c, p + oy*W + ox], zeros where the per-image source is
        # outside the image ('same' conv halo).  Masks are per-image, so rolling
        # the whole batched lane slab never leaks pixels across image boundaries.
        if oy == 0 and ox == 0:
            return v
        s = oy * img_w + ox
        r = pltpu.roll(v, shift=(-s) % LB, axis=1)
        return r * mask_ref[pl.ds(off_index[(oy, ox)], 1), :]

    # --- 1) pre_channel_mixer: 1x1 conv + bias (padded to aligned branch blocks) --
    x = x_ref[...]                                                     # bf16
    y = jnp.dot(wpre_ref[...], x, preferred_element_type=jnp.float32) + bpre_ref[...]
    cmid_pad = y.shape[0]
    cb_pad = cmid_pad // 3
    chunks = [y[b * cb_pad:(b + 1) * cb_pad, :] for b in range(3)]     # aligned

    # --- 2+3) dilated 3x3 branches + 1x1 post-mixer + BN + ReLU6, fused ----------
    # One K-stacked matmul: 27 shifted pieces (9 taps x 3 branches) on sublanes.
    pieces = []
    for ky in range(3):
        for kx in range(3):
            for b, d in enumerate(dilation):
                pieces.append(shifted(chunks[b], (ky - 1) * d, (kx - 1) * d))
    patches = jnp.concatenate(pieces, axis=0).astype(jnp.bfloat16)     # (9*Cmid_p, LB)
    z = jnp.dot(w1_ref[...], patches, preferred_element_type=jnp.float32) + b1_ref[...]
    z = jnp.clip(z, 0.0, 6.0)                                          # (Cout_p, LB)

    # --- 4) post 3x3 conv + BN + ReLU6, fused into one K-stacked matmul ----------
    pieces2 = [shifted(z, ky - 1, kx - 1) for ky in range(3) for kx in range(3)]
    patches2 = jnp.concatenate(pieces2, axis=0).astype(jnp.bfloat16)   # (9*Cout_p, LB)
    out = jnp.dot(w2_ref[...], patches2, preferred_element_type=jnp.float32) + t2_ref[...]
    out_ref[...] = jnp.clip(out, 0.0, 6.0).astype(out_ref.dtype)       # lane-dense store


# ----------------------------------------------------------------------------------
# Wrapper
# ----------------------------------------------------------------------------------
def mdc_block_forward(x_nchw, kernel_params, dilation=(1, 2, 3)):
    wpre, bpre, w1f, b1p, w2f, t2c = kernel_params
    N, Cin, H, W = x_nchw.shape
    HW = H * W
    Cout = w2f.shape[0]

    B = _pick_images_per_step(N, HW)
    LB = B * HW
    grid_n = N // B

    # channels-first lane slab (Cin, N*HW); bf16 halves the input DMA
    x_slab = jnp.transpose(x_nchw, (1, 0, 2, 3)).reshape(Cin, N * HW).astype(jnp.bfloat16)

    masks = _build_masks(_mask_offsets(dilation), H, W, B)             # (n_off, LB)

    kernel = functools.partial(mdc_block_kernel, dilation=tuple(dilation), img_w=W)

    params = (wpre, bpre, w1f, b1p, w2f, t2c)
    param_specs = [pl.BlockSpec(p.shape, lambda i, nd=p.ndim: (0,) * nd) for p in params]

    out_slab = pl.pallas_call(
        kernel,
        out_shape=jax.ShapeDtypeStruct((Cout, N * HW), jnp.float32),
        grid=(grid_n,),
        in_specs=[pl.BlockSpec((Cin, LB), lambda i: (0, i)),
                  pl.BlockSpec(masks.shape, lambda i: (0, 0))] + param_specs,
        out_specs=pl.BlockSpec((Cout, LB), lambda i: (0, i)),
        compiler_params=pltpu.CompilerParams(dimension_semantics=("parallel",)),
    )(x_slab, masks, *params)

    return jnp.transpose(out_slab.reshape(Cout, N, H, W), (1, 0, 2, 3))


# ----------------------------------------------------------------------------------
# Deterministic parameter init (PyTorch OIHW shapes) + folded kernel-layout params
# ----------------------------------------------------------------------------------
_MID_CHANNELS = {256: 3 * 86, 128: 3 * 43, 64: 3 * 21, 32: 3 * 10, 16: 3 * 5}


def init_params(key, in_channels, out_channels):
    mid = _MID_CHANNELS[in_channels]
    Cb = mid // 3
    ks = jax.random.split(key, 20)

    def nrm(k, shape, scale=0.1):
        return scale * jax.random.normal(k, shape, jnp.float32)

    p = {}
    p["w_pre"] = nrm(ks[0], (mid, in_channels, 1, 1))
    p["b_pre"] = nrm(ks[1], (mid,))
    p["w1"] = nrm(ks[2], (Cb, Cb, 3, 3)); p["b1"] = nrm(ks[3], (Cb,))
    p["w2"] = nrm(ks[4], (Cb, Cb, 3, 3)); p["b2"] = nrm(ks[5], (Cb,))
    p["w3"] = nrm(ks[6], (Cb, Cb, 3, 3)); p["b3"] = nrm(ks[7], (Cb,))
    p["wp1"] = nrm(ks[8], (out_channels, mid, 1, 1))
    p["wp2"] = nrm(ks[9], (out_channels, out_channels, 3, 3))

    def bn_fold(kg, kb, km, kv, c, eps=1e-5):
        gamma = 1.0 + 0.1 * jax.random.normal(kg, (c,), jnp.float32)
        beta = 0.1 * jax.random.normal(kb, (c,), jnp.float32)
        mean = 0.1 * jax.random.normal(km, (c,), jnp.float32)
        var = 1.0 + 0.1 * jax.random.uniform(kv, (c,), jnp.float32)
        scale = gamma / jnp.sqrt(var + eps)
        shift = beta - mean * scale
        return scale, shift

    p["s1"], p["t1"] = bn_fold(ks[10], ks[11], ks[12], ks[13], out_channels)
    p["s2"], p["t2"] = bn_fold(ks[14], ks[15], ks[16], ks[17], out_channels)

    # ---- kernel-layout params: padded, BN/wp1-folded, bf16, K-stacked ----------
    cb_pad = _round_up(Cb, 8)
    cmid_pad = 3 * cb_pad
    cout_pad = _round_up(out_channels, 8)

    wpre2d = p["w_pre"][:, :, 0, 0]
    wpre_pad = jnp.zeros((cmid_pad, in_channels), jnp.float32)
    bpre_pad = jnp.zeros((cmid_pad,), jnp.float32)
    for b in range(3):
        wpre_pad = wpre_pad.at[b * cb_pad:b * cb_pad + Cb].set(wpre2d[b * Cb:(b + 1) * Cb])
        bpre_pad = bpre_pad.at[b * cb_pad:b * cb_pad + Cb].set(p["b_pre"][b * Cb:(b + 1) * Cb])

    wp1_2d = p["wp1"][:, :, 0, 0]
    branch_w = (p["w1"], p["w2"], p["w3"])
    s1, t1, s2, t2 = p["s1"], p["t1"], p["s2"], p["t2"]

    # stage 2+3: W1'[tap] = diag(s1) @ wp1 @ BlockDiag(tap); K-stacked over 9 taps
    w1_cols = []
    for ky in range(3):
        for kx in range(3):
            A = jnp.zeros((out_channels, cmid_pad), jnp.float32)
            for b in range(3):
                blk = wp1_2d[:, b * Cb:(b + 1) * Cb] @ branch_w[b][:, :, ky, kx]
                A = A.at[:, b * cb_pad:b * cb_pad + Cb].set(blk)
            w1_cols.append(s1[:, None] * A)
    w1_fused = jnp.concatenate(w1_cols, axis=1)                     # (Cout, 9*Cmid_pad)
    w1_fused = jnp.pad(w1_fused, ((0, cout_pad - out_channels), (0, 0)))

    b_cat = jnp.concatenate([p["b1"], p["b2"], p["b3"]])
    b1p = s1 * (wp1_2d @ b_cat) + t1
    b1p = jnp.pad(b1p, (0, cout_pad - out_channels)).reshape(cout_pad, 1)

    # stage 4: W2'[tap] = diag(s2) @ wp2[:, :, tap]; K-stacked over 9 taps
    w2_cols = []
    for ky in range(3):
        for kx in range(3):
            A = jnp.zeros((out_channels, cout_pad), jnp.float32)
            A = A.at[:, :out_channels].set(s2[:, None] * p["wp2"][:, :, ky, kx])
            w2_cols.append(A)
    w2_fused = jnp.concatenate(w2_cols, axis=1)                     # (Cout, 9*Cout_pad)

    kernel_params = (
        wpre_pad.astype(jnp.bfloat16),            # (Cmid_pad, Cin)
        bpre_pad.reshape(cmid_pad, 1),            # f32
        w1_fused.astype(jnp.bfloat16),            # (Cout_pad, 9*Cmid_pad)
        b1p,                                      # (Cout_pad, 1) f32
        w2_fused.astype(jnp.bfloat16),            # (Cout, 9*Cout_pad)
        t2.reshape(out_channels, 1),              # f32
    )
    return p, kernel_params


# ----------------------------------------------------------------------------------
# Pure-JAX reference (NCHW, eval-mode BN folded), high precision for a tight check
# ----------------------------------------------------------------------------------
def _conv_nchw(x, w_oihw, b, dilation=1, padding=0):
    y = lax.conv_general_dilated(
        x, w_oihw, window_strides=(1, 1),
        padding=[(padding, padding), (padding, padding)],
        rhs_dilation=(dilation, dilation),
        dimension_numbers=("NCHW", "OIHW", "NCHW"),
        precision=lax.Precision.HIGHEST)
    if b is not None:
        y = y + b.reshape(1, -1, 1, 1)
    return y


def reference_forward(x, p, dilation=(1, 2, 3)):
    y = _conv_nchw(x, p["w_pre"], p["b_pre"], 1, 0)
    Cb = y.shape[1] // 3
    y1 = _conv_nchw(y[:, 0:Cb],          p["w1"], p["b1"], dilation[0], dilation[0])
    y2 = _conv_nchw(y[:, Cb:2 * Cb],     p["w2"], p["b2"], dilation[1], dilation[1])
    y3 = _conv_nchw(y[:, 2 * Cb:3 * Cb], p["w3"], p["b3"], dilation[2], dilation[2])
    y = jnp.concatenate([y1, y2, y3], axis=1)
    z = _conv_nchw(y, p["wp1"], None, 1, 0)
    z = jnp.clip(z * p["s1"].reshape(1, -1, 1, 1) + p["t1"].reshape(1, -1, 1, 1), 0.0, 6.0)
    z = _conv_nchw(z, p["wp2"], None, 1, 1)
    z = jnp.clip(z * p["s2"].reshape(1, -1, 1, 1) + p["t2"].reshape(1, -1, 1, 1), 0.0, 6.0)
    return z


# ----------------------------------------------------------------------------------
if __name__ == "__main__":
    key = jax.random.PRNGKey(0)
    k_x, k_p = jax.random.split(key)

    # small shapes: batch=2, in_channels=16 (-> mid=15), out_channels=16, spatial=16
    N, Cin, H, W = 2, 16, 16, 16
    Cout = 16

    x_nchw = jax.random.normal(k_x, (N, Cin, H, W), jnp.float32)
    torch_params, kernel_params = init_params(k_p, Cin, Cout)

    out = jax.block_until_ready(mdc_block_forward(x_nchw, kernel_params))

    ref = reference_forward(x_nchw, torch_params)
    assert out.shape == ref.shape == (N, Cout, H, W)
    max_err = float(jnp.max(jnp.abs(out - ref)))
    # Kernel uses bf16 matmul operands (f32 accumulation) across a 3-matmul chain,
    # so allow bf16-operand-level error vs the HIGHEST-precision f32 reference.
    if max_err > 5e-2:
        raise AssertionError(f"Pallas kernel mismatch vs reference, max_err={max_err}")

    print("KERNEL_OK")
</pallas_src>

<mosaic_0001>
module attributes {stable_mosaic.version = 11 : i64} {
  func.func @mdc_block_kernel(%arg0: i32, %arg1: memref<16x512xbf16, #tpu.memory_space<vmem>>, %arg2: memref<24x512xf32, #tpu.memory_space<vmem>>, %arg3: memref<24x16xbf16, #tpu.memory_space<vmem>>, %arg4: memref<24x1xf32, #tpu.memory_space<vmem>>, %arg5: memref<16x216xbf16, #tpu.memory_space<vmem>>, %arg6: memref<16x1xf32, #tpu.memory_space<vmem>>, %arg7: memref<16x144xbf16, #tpu.memory_space<vmem>>, %arg8: memref<16x1xf32, #tpu.memory_space<vmem>>, %arg9: memref<16x512xf32, #tpu.memory_space<vmem>>) attributes {dimension_semantics = [#tpu.dimension_semantics<parallel>], iteration_bounds = array<i64: 1>, scalar_prefetch = 0 : i64, scratch_operands = 0 : i64, tpu.core_type = #tpu.core_type<tc>, window_params = [{transform_indices = @transform_0, window_bounds = array<i64: 16, 512>}, {pipeline_mode = #tpu.pipeline_mode<synchronous>, transform_indices = @transform_1, window_bounds = array<i64: 24, 512>}, {pipeline_mode = #tpu.pipeline_mode<synchronous>, transform_indices = @transform_2, window_bounds = array<i64: 24, 16>}, {pipeline_mode = #tpu.pipeline_mode<synchronous>, transform_indices = @transform_3, window_bounds = array<i64: 24, 1>}, {pipeline_mode = #tpu.pipeline_mode<synchronous>, transform_indices = @transform_4, window_bounds = array<i64: 16, 216>}, {pipeline_mode = #tpu.pipeline_mode<synchronous>, transform_indices = @transform_5, window_bounds = array<i64: 16, 1>}, {pipeline_mode = #tpu.pipeline_mode<synchronous>, transform_indices = @transform_6, window_bounds = array<i64: 16, 144>}, {pipeline_mode = #tpu.pipeline_mode<synchronous>, transform_indices = @transform_7, window_bounds = array<i64: 16, 1>}, {transform_indices = @transform_8, window_bounds = array<i64: 16, 512>}]} {
    %c0 = arith.constant 0 : index
    %c0_0 = arith.constant 0 : index
    %0 = vector.load %arg1[%c0, %c0_0] : memref<16x512xbf16, #tpu.memory_space<vmem>>, vector<16x512xbf16>
    %c0_1 = arith.constant 0 : index
    %c0_2 = arith.constant 0 : index
    %1 = vector.load %arg3[%c0_1, %c0_2] : memref<24x16xbf16, #tpu.memory_space<vmem>>, vector<24x16xbf16>
    %cst = arith.constant dense<0.000000e+00> : vector<24x512xf32>
    %2 = tpu.matmul %1, %0, %cst {dimension_numbers = #tpu.dot_dimension_numbers<[1], [0], [0], [1], [0, 0, 1, 1], [], []>} : vector<24x16xbf16>, vector<16x512xbf16>, vector<24x512xf32> -> vector<24x512xf32>
    %c0_3 = arith.constant 0 : index
    %c0_4 = arith.constant 0 : index
    %3 = vector.load %arg4[%c0_3, %c0_4] : memref<24x1xf32, #tpu.memory_space<vmem>>, vector<24x1xf32>
    %4 = vector.broadcast %3 : vector<24x1xf32> to vector<24x512xf32>
    %5 = arith.addf %2, %4 : vector<24x512xf32>
    %6 = vector.extract_strided_slice %5 {offsets = [0, 0], sizes = [8, 512], strides = [1, 1]} : vector<24x512xf32> to vector<8x512xf32>
    %7 = vector.extract_strided_slice %5 {offsets = [8, 0], sizes = [8, 512], strides = [1, 1]} : vector<24x512xf32> to vector<8x512xf32>
    %8 = vector.extract_strided_slice %5 {offsets = [16, 0], sizes = [8, 512], strides = [1, 1]} : vector<24x512xf32> to vector<8x512xf32>
    %c17_i32 = arith.constant 17 : i32
    %9 = tpu.dynamic_rotate %6 by %c17_i32 dim 1 : vector<8x512xf32>, i32 -> vector<8x512xf32>
    %c0_5 = arith.constant 0 : index
    %c0_6 = arith.constant 0 : index
    %10 = vector.load %arg2[%c0_5, %c0_6] : memref<24x512xf32, #tpu.memory_space<vmem>>, vector<1x512xf32>
    %11 = vector.broadcast %10 : vector<1x512xf32> to vector<8x512xf32>
    %12 = arith.mulf %9, %11 : vector<8x512xf32>
    %c34_i32 = arith.constant 34 : i32
    %13 = tpu.dynamic_rotate %7 by %c34_i32 dim 1 : vector<8x512xf32>, i32 -> vector<8x512xf32>
    %c8 = arith.constant 8 : index
    %c0_7 = arith.constant 0 : index
    %14 = vector.load %arg2[%c8, %c0_7] : memref<24x512xf32, #tpu.memory_space<vmem>>, vector<1x512xf32>
    %15 = vector.broadcast %14 : vector<1x512xf32> to vector<8x512xf32>
    %16 = arith.mulf %13, %15 : vector<8x512xf32>
    %c51_i32 = arith.constant 51 : i32
    %17 = tpu.dynamic_rotate %8 by %c51_i32 dim 1 : vector<8x512xf32>, i32 -> vector<8x512xf32>
    %c16 = arith.constant 16 : index
    %c0_8 = arith.constant 0 : index
    %18 = vector.load %arg2[%c16, %c0_8] : memref<24x512xf32, #tpu.memory_space<vmem>>, vector<1x512xf32>
    %19 = vector.broadcast %18 : vector<1x512xf32> to vector<8x512xf32>
    %20 = arith.mulf %17, %19 : vector<8x512xf32>
    %c16_i32 = arith.constant 16 : i32
    %21 = tpu.dynamic_rotate %6 by %c16_i32 dim 1 : vector<8x512xf32>, i32 -> vector<8x512xf32>
    %c1 = arith.constant 1 : index
    %c0_9 = arith.constant 0 : index
    %22 = vector.load %arg2[%c1, %c0_9] : memref<24x512xf32, #tpu.memory_space<vmem>>, vector<1x512xf32>
    %23 = vector.broadcast %22 : vector<1x512xf32> to vector<8x512xf32>
    %24 = arith.mulf %21, %23 : vector<8x512xf32>
    %c32_i32 = arith.constant 32 : i32
    %25 = tpu.dynamic_rotate %7 by %c32_i32 dim 1 : vector<8x512xf32>, i32 -> vector<8x512xf32>
    %c9 = arith.constant 9 : index
    %c0_10 = arith.constant 0 : index
    %26 = vector.load %arg2[%c9, %c0_10] : memref<24x512xf32, #tpu.memory_space<vmem>>, vector<1x512xf32>
    %27 = vector.broadcast %26 : vector<1x512xf32> to vector<8x512xf32>
    %28 = arith.mulf %25, %27 : vector<8x512xf32>
    %c48_i32 = arith.constant 48 : i32
    %29 = tpu.dynamic_rotate %8 by %c48_i32 dim 1 : vector<8x512xf32>, i32 -> vector<8x512xf32>
    %c17 = arith.constant 17 : index
    %c0_11 = arith.constant 0 : index
    %30 = vector.load %arg2[%c17, %c0_11] : memref<24x512xf32, #tpu.memory_space<vmem>>, vector<1x512xf32>
    %31 = vector.broadcast %30 : vector<1x512xf32> to vector<8x512xf32>
    %32 = arith.mulf %29, %31 : vector<8x512xf32>
    %c15_i32 = arith.constant 15 : i32
    %33 = tpu.dynamic_rotate %6 by %c15_i32 dim 1 : vector<8x512xf32>, i32 -> vector<8x512xf32>
    %c2 = arith.constant 2 : index
    %c0_12 = arith.constant 0 : index
    %34 = vector.load %arg2[%c2, %c0_12] : memref<24x512xf32, #tpu.memory_space<vmem>>, vector<1x512xf32>
    %35 = vector.broadcast %34 : vector<1x512xf32> to vector<8x512xf32>
    %36 = arith.mulf %33, %35 : vector<8x512xf32>
    %c30_i32 = arith.constant 30 : i32
    %37 = tpu.dynamic_rotate %7 by %c30_i32 dim 1 : vector<8x512xf32>, i32 -> vector<8x512xf32>
    %c10 = arith.constant 10 : index
    %c0_13 = arith.constant 0 : index
    %38 = vector.load %arg2[%c10, %c0_13] : memref<24x512xf32, #tpu.memory_space<vmem>>, vector<1x512xf32>
    %39 = vector.broadcast %38 : vector<1x512xf32> to vector<8x512xf32>
    %40 = arith.mulf %37, %39 : vector<8x512xf32>
    %c45_i32 = arith.constant 45 : i32
    %41 = tpu.dynamic_rotate %8 by %c45_i32 dim 1 : vector<8x512xf32>, i32 -> vector<8x512xf32>
    %c18 = arith.constant 18 : index
    %c0_14 = arith.constant 0 : index
    %42 = vector.load %arg2[%c18, %c0_14] : memref<24x512xf32, #tpu.memory_space<vmem>>, vector<1x512xf32>
    %43 = vector.broadcast %42 : vector<1x512xf32> to vector<8x512xf32>
    %44 = arith.mulf %41, %43 : vector<8x512xf32>
    %c1_i32 = arith.constant 1 : i32
    %45 = tpu.dynamic_rotate %6 by %c1_i32 dim 1 : vector<8x512xf32>, i32 -> vector<8x512xf32>
    %c3 = arith.constant 3 : index
    %c0_15 = arith.constant 0 : index
    %46 = vector.load %arg2[%c3, %c0_15] : memref<24x512xf32, #tpu.memory_space<vmem>>, vector<1x512xf32>
    %47 = vector.broadcast %46 : vector<1x512xf32> to vector<8x512xf32>
    %48 = arith.mulf %45, %47 : vector<8x512xf32>
    %c2_i32 = arith.constant 2 : i32
    %49 = tpu.dynamic_rotate %7 by %c2_i32 dim 1 : vector<8x512xf32>, i32 -> vector<8x512xf32>
    %c11 = arith.constant 11 : index
    %c0_16 = arith.constant 0 : index
    %50 = vector.load %arg2[%c11, %c0_16] : memref<24x512xf32, #tpu.memory_space<vmem>>, vector<1x512xf32>
    %51 = vector.broadcast %50 : vector<1x512xf32> to vector<8x512xf32>
    %52 = arith.mulf %49, %51 : vector<8x512xf32>
    %c3_i32 = arith.constant 3 : i32
    %53 = tpu.dynamic_rotate %8 by %c3_i32 dim 1 : vector<8x512xf32>, i32 -> vector<8x512xf32>
    %c19 = arith.constant 19 : index
    %c0_17 = arith.constant 0 : index
    %54 = vector.load %arg2[%c19, %c0_17] : memref<24x512xf32, #tpu.memory_space<vmem>>, vector<1x512xf32>
    %55 = vector.broadcast %54 : vector<1x512xf32> to vector<8x512xf32>
    %56 = arith.mulf %53, %55 : vector<8x512xf32>
    %c511_i32 = arith.constant 511 : i32
    %57 = tpu.dynamic_rotate %6 by %c511_i32 dim 1 : vector<8x512xf32>, i32 -> vector<8x512xf32>
    %c4 = arith.constant 4 : index
    %c0_18 = arith.constant 0 : index
    %58 = vector.load %arg2[%c4, %c0_18] : memref<24x512xf32, #tpu.memory_space<vmem>>, vector<1x512xf32>
    %59 = vector.broadcast %58 : vector<1x512xf32> to vector<8x512xf32>
    %60 = arith.mulf %57, %59 : vector<8x512xf32>
    %c510_i32 = arith.constant 510 : i32
    %61 = tpu.dynamic_rotate %7 by %c510_i32 dim 1 : vector<8x512xf32>, i32 -> vector<8x512xf32>
    %c12 = arith.constant 12 : index
    %c0_19 = arith.constant 0 : index
    %62 = vector.load %arg2[%c12, %c0_19] : memref<24x512xf32, #tpu.memory_space<vmem>>, vector<1x512xf32>
    %63 = vector.broadcast %62 : vector<1x512xf32> to vector<8x512xf32>
    %64 = arith.mulf %61, %63 : vector<8x512xf32>
    %c509_i32 = arith.constant 509 : i32
    %65 = tpu.dynamic_rotate %8 by %c509_i32 dim 1 : vector<8x512xf32>, i32 -> vector<8x512xf32>
    %c20 = arith.constant 20 : index
    %c0_20 = arith.constant 0 : index
    %66 = vector.load %arg2[%c20, %c0_20] : memref<24x512xf32, #tpu.memory_space<vmem>>, vector<1x512xf32>
    %67 = vector.broadcast %66 : vector<1x512xf32> to vector<8x512xf32>
    %68 = arith.mulf %65, %67 : vector<8x512xf32>
    %c497_i32 = arith.constant 497 : i32
    %69 = tpu.dynamic_rotate %6 by %c497_i32 dim 1 : vector<8x512xf32>, i32 -> vector<8x512xf32>
    %c5 = arith.constant 5 : index
    %c0_21 = arith.constant 0 : index
    %70 = vector.load %arg2[%c5, %c0_21] : memref<24x512xf32, #tpu.memory_space<vmem>>, vector<1x512xf32>
    %71 = vector.broadcast %70 : vector<1x512xf32> to vector<8x512xf32>
    %72 = arith.mulf %69, %71 : vector<8x512xf32>
    %c482_i32 = arith.constant 482 : i32
    %73 = tpu.dynamic_rotate %7 by %c482_i32 dim 1 : vector<8x512xf32>, i32 -> vector<8x512xf32>
    %c13 = arith.constant 13 : index
    %c0_22 = arith.constant 0 : index
    %74 = vector.load %arg2[%c13, %c0_22] : memref<24x512xf32, #tpu.memory_space<vmem>>, vector<1x512xf32>
    %75 = vector.broadcast %74 : vector<1x512xf32> to vector<8x512xf32>
    %76 = arith.mulf %73, %75 : vector<8x512xf32>
    %c467_i32 = arith.constant 467 : i32
    %77 = tpu.dynamic_rotate %8 by %c467_i32 dim 1 : vector<8x512xf32>, i32 -> vector<8x512xf32>
    %c21 = arith.constant 21 : index
    %c0_23 = arith.constant 0 : index
    %78 = vector.load %arg2[%c21, %c0_23] : memref<24x512xf32, #tpu.memory_space<vmem>>, vector<1x512xf32>
    %79 = vector.broadcast %78 : vector<1x512xf32> to vector<8x512xf32>
    %80 = arith.mulf %77, %79 : vector<8x512xf32>
    %c496_i32 = arith.constant 496 : i32
    %81 = tpu.dynamic_rotate %6 by %c496_i32 dim 1 : vector<8x512xf32>, i32 -> vector<8x512xf32>
    %c6 = arith.constant 6 : index
    %c0_24 = arith.constant 0 : index
    %82 = vector.load %arg2[%c6, %c0_24] : memref<24x512xf32, #tpu.memory_space<vmem>>, vector<1x512xf32>
    %83 = vector.broadcast %82 : vector<1x512xf32> to vector<8x512xf32>
    %84 = arith.mulf %81, %83 : vector<8x512xf32>
    %c480_i32 = arith.constant 480 : i32
    %85 = tpu.dynamic_rotate %7 by %c480_i32 dim 1 : vector<8x512xf32>, i32 -> vector<8x512xf32>
    %c14 = arith.constant 14 : index
    %c0_25 = arith.constant 0 : index
    %86 = vector.load %arg2[%c14, %c0_25] : memref<24x512xf32, #tpu.memory_space<vmem>>, vector<1x512xf32>
    %87 = vector.broadcast %86 : vector<1x512xf32> to vector<8x512xf32>
    %88 = arith.mulf %85, %87 : vector<8x512xf32>
    %c464_i32 = arith.constant 464 : i32
    %89 = tpu.dynamic_rotate %8 by %c464_i32 dim 1 : vector<8x512xf32>, i32 -> vector<8x512xf32>
    %c22 = arith.constant 22 : index
    %c0_26 = arith.constant 0 : index
    %90 = vector.load %arg2[%c22, %c0_26] : memref<24x512xf32, #tpu.memory_space<vmem>>, vector<1x512xf32>
    %91 = vector.broadcast %90 : vector<1x512xf32> to vector<8x512xf32>
    %92 = arith.mulf %89, %91 : vector<8x512xf32>
    %c495_i32 = arith.constant 495 : i32
    %93 = tpu.dynamic_rotate %6 by %c495_i32 dim 1 : vector<8x512xf32>, i32 -> vector<8x512xf32>
    %c7 = arith.constant 7 : index
    %c0_27 = arith.constant 0 : index
    %94 = vector.load %arg2[%c7, %c0_27] : memref<24x512xf32, #tpu.memory_space<vmem>>, vector<1x512xf32>
    %95 = vector.broadcast %94 : vector<1x512xf32> to vector<8x512xf32>
    %96 = arith.mulf %93, %95 : vector<8x512xf32>
    %c478_i32 = arith.constant 478 : i32
    %97 = tpu.dynamic_rotate %7 by %c478_i32 dim 1 : vector<8x512xf32>, i32 -> vector<8x512xf32>
    %c15 = arith.constant 15 : index
    %c0_28 = arith.constant 0 : index
    %98 = vector.load %arg2[%c15, %c0_28] : memref<24x512xf32, #tpu.memory_space<vmem>>, vector<1x512xf32>
    %99 = vector.broadcast %98 : vector<1x512xf32> to vector<8x512xf32>
    %100 = arith.mulf %97, %99 : vector<8x512xf32>
    %c461_i32 = arith.constant 461 : i32
    %101 = tpu.dynamic_rotate %8 by %c461_i32 dim 1 : vector<8x512xf32>, i32 -> vector<8x512xf32>
    %c23 = arith.constant 23 : index
    %c0_29 = arith.constant 0 : index
    %102 = vector.load %arg2[%c23, %c0_29] : memref<24x512xf32, #tpu.memory_space<vmem>>, vector<1x512xf32>
    %103 = vector.broadcast %102 : vector<1x512xf32> to vector<8x512xf32>
    %104 = arith.mulf %101, %103 : vector<8x512xf32>
    %105 = tpu.concatenate %12, %16, %20, %24, %28, %32, %36, %40, %44, %48, %52, %56, %6, %7, %8, %60 in 0 : vector<8x512xf32>, vector<8x512xf32>, vector<8x512xf32>, vector<8x512xf32>, vector<8x512xf32>, vector<8x512xf32>, vector<8x512xf32>, vector<8x512xf32>, vector<8x512xf32>, vector<8x512xf32>, vector<8x512xf32>, vector<8x512xf32>, vector<8x512xf32>, vector<8x512xf32>, vector<8x512xf32>, vector<8x512xf32> -> vector<128x512xf32>
    %106 = tpu.concatenate %64, %68, %72, %76, %80, %84, %88, %92, %96, %100, %104 in 0 : vector<8x512xf32>, vector<8x512xf32>, vector<8x512xf32>, vector<8x512xf32>, vector<8x512xf32>, vector<8x512xf32>, vector<8x512xf32>, vector<8x512xf32>, vector<8x512xf32>, vector<8x512xf32>, vector<8x512xf32> -> vector<88x512xf32>
    %107 = tpu.concatenate %105, %106 in 0 : vector<128x512xf32>, vector<88x512xf32> -> vector<216x512xf32>
    %108 = arith.truncf %107 : vector<216x512xf32> to vector<216x512xbf16>
    %c0_30 = arith.constant 0 : index
    %c0_31 = arith.constant 0 : index
    %109 = vector.load %arg5[%c0_30, %c0_31] : memref<16x216xbf16, #tpu.memory_space<vmem>>, vector<16x216xbf16>
    %cst_32 = arith.constant dense<0.000000e+00> : vector<16x512xf32>
    %110 = tpu.matmul %109, %108, %cst_32 {dimension_numbers = #tpu.dot_dimension_numbers<[1], [0], [0], [1], [0, 0, 1, 1], [], []>} : vector<16x216xbf16>, vector<216x512xbf16>, vector<16x512xf32> -> vector<16x512xf32>
    %c0_33 = arith.constant 0 : index
    %c0_34 = arith.constant 0 : index
    %111 = vector.load %arg6[%c0_33, %c0_34] : memref<16x1xf32, #tpu.memory_space<vmem>>, vector<16x1xf32>
    %112 = vector.broadcast %111 : vector<16x1xf32> to vector<16x512xf32>
    %113 = arith.addf %110, %112 : vector<16x512xf32>
    %cst_35 = arith.constant 0.000000e+00 : f32
    %cst_36 = arith.constant 6.000000e+00 : f32
    %114 = vector.broadcast %cst_35 : f32 to vector<16x512xf32>
    %115 = arith.maximumf %114, %113 : vector<16x512xf32>
    %116 = vector.broadcast %cst_36 : f32 to vector<16x512xf32>
    %117 = arith.minimumf %116, %115 : vector<16x512xf32>
    %c17_i32_37 = arith.constant 17 : i32
    %118 = tpu.dynamic_rotate %117 by %c17_i32_37 dim 1 : vector<16x512xf32>, i32 -> vector<16x512xf32>
    %c0_38 = arith.constant 0 : index
    %c0_39 = arith.constant 0 : index
    %119 = vector.load %arg2[%c0_38, %c0_39] : memref<24x512xf32, #tpu.memory_space<vmem>>, vector<1x512xf32>
    %120 = vector.broadcast %119 : vector<1x512xf32> to vector<16x512xf32>
    %121 = arith.mulf %118, %120 : vector<16x512xf32>
    %c16_i32_40 = arith.constant 16 : i32
    %122 = tpu.dynamic_rotate %117 by %c16_i32_40 dim 1 : vector<16x512xf32>, i32 -> vector<16x512xf32>
    %c1_41 = arith.constant 1 : index
    %c0_42 = arith.constant 0 : index
    %123 = vector.load %arg2[%c1_41, %c0_42] : memref<24x512xf32, #tpu.memory_space<vmem>>, vector<1x512xf32>
    %124 = vector.broadcast %123 : vector<1x512xf32> to vector<16x512xf32>
    %125 = arith.mulf %122, %124 : vector<16x512xf32>
    %c15_i32_43 = arith.constant 15 : i32
    %126 = tpu.dynamic_rotate %117 by %c15_i32_43 dim 1 : vector<16x512xf32>, i32 -> vector<16x512xf32>
    %c2_44 = arith.constant 2 : index
    %c0_45 = arith.constant 0 : index
    %127 = vector.load %arg2[%c2_44, %c0_45] : memref<24x512xf32, #tpu.memory_space<vmem>>, vector<1x512xf32>
    %128 = vector.broadcast %127 : vector<1x512xf32> to vector<16x512xf32>
    %129 = arith.mulf %126, %128 : vector<16x512xf32>
    %c1_i32_46 = arith.constant 1 : i32
    %130 = tpu.dynamic_rotate %117 by %c1_i32_46 dim 1 : vector<16x512xf32>, i32 -> vector<16x512xf32>
    %c3_47 = arith.constant 3 : index
    %c0_48 = arith.constant 0 : index
    %131 = vector.load %arg2[%c3_47, %c0_48] : memref<24x512xf32, #tpu.memory_space<vmem>>, vector<1x512xf32>
    %132 = vector.broadcast %131 : vector<1x512xf32> to vector<16x512xf32>
    %133 = arith.mulf %130, %132 : vector<16x512xf32>
    %c511_i32_49 = arith.constant 511 : i32
    %134 = tpu.dynamic_rotate %117 by %c511_i32_49 dim 1 : vector<16x512xf32>, i32 -> vector<16x512xf32>
    %c4_50 = arith.constant 4 : index
    %c0_51 = arith.constant 0 : index
    %135 = vector.load %arg2[%c4_50, %c0_51] : memref<24x512xf32, #tpu.memory_space<vmem>>, vector<1x512xf32>
    %136 = vector.broadcast %135 : vector<1x512xf32> to vector<16x512xf32>
    %137 = arith.mulf %134, %136 : vector<16x512xf32>
    %c497_i32_52 = arith.constant 497 : i32
    %138 = tpu.dynamic_rotate %117 by %c497_i32_52 dim 1 : vector<16x512xf32>, i32 -> vector<16x512xf32>
    %c5_53 = arith.constant 5 : index
    %c0_54 = arith.constant 0 : index
    %139 = vector.load %arg2[%c5_53, %c0_54] : memref<24x512xf32, #tpu.memory_space<vmem>>, vector<1x512xf32>
    %140 = vector.broadcast %139 : vector<1x512xf32> to vector<16x512xf32>
    %141 = arith.mulf %138, %140 : vector<16x512xf32>
    %c496_i32_55 = arith.constant 496 : i32
    %142 = tpu.dynamic_rotate %117 by %c496_i32_55 dim 1 : vector<16x512xf32>, i32 -> vector<16x512xf32>
    %c6_56 = arith.constant 6 : index
    %c0_57 = arith.constant 0 : index
    %143 = vector.load %arg2[%c6_56, %c0_57] : memref<24x512xf32, #tpu.memory_space<vmem>>, vector<1x512xf32>
    %144 = vector.broadcast %143 : vector<1x512xf32> to vector<16x512xf32>
    %145 = arith.mulf %142, %144 : vector<16x512xf32>
    %c495_i32_58 = arith.constant 495 : i32
    %146 = tpu.dynamic_rotate %117 by %c495_i32_58 dim 1 : vector<16x512xf32>, i32 -> vector<16x512xf32>
    %c7_59 = arith.constant 7 : index
    %c0_60 = arith.constant 0 : index
    %147 = vector.load %arg2[%c7_59, %c0_60] : memref<24x512xf32, #tpu.memory_space<vmem>>, vector<1x512xf32>
    %148 = vector.broadcast %147 : vector<1x512xf32> to vector<16x512xf32>
    %149 = arith.mulf %146, %148 : vector<16x512xf32>
    %150 = tpu.concatenate %121, %125, %129, %133, %117, %137, %141, %145, %149 in 0 : vector<16x512xf32>, vector<16x512xf32>, vector<16x512xf32>, vector<16x512xf32>, vector<16x512xf32>, vector<16x512xf32>, vector<16x512xf32>, vector<16x512xf32>, vector<16x512xf32> -> vector<144x512xf32>
    %151 = arith.truncf %150 : vector<144x512xf32> to vector<144x512xbf16>
    %c0_61 = arith.constant 0 : index
    %c0_62 = arith.constant 0 : index
    %152 = vector.load %arg7[%c0_61, %c0_62] : memref<16x144xbf16, #tpu.memory_space<vmem>>, vector<16x144xbf16>
    %cst_63 = arith.constant dense<0.000000e+00> : vector<16x512xf32>
    %153 = tpu.matmul %152, %151, %cst_63 {dimension_numbers = #tpu.dot_dimension_numbers<[1], [0], [0], [1], [0, 0, 1, 1], [], []>} : vector<16x144xbf16>, vector<144x512xbf16>, vector<16x512xf32> -> vector<16x512xf32>
    %c0_64 = arith.constant 0 : index
    %c0_65 = arith.constant 0 : index
    %154 = vector.load %arg8[%c0_64, %c0_65] : memref<16x1xf32, #tpu.memory_space<vmem>>, vector<16x1xf32>
    %155 = vector.broadcast %154 : vector<16x1xf32> to vector<16x512xf32>
    %156 = arith.addf %153, %155 : vector<16x512xf32>
    %cst_66 = arith.constant 0.000000e+00 : f32
    %cst_67 = arith.constant 6.000000e+00 : f32
    %157 = vector.broadcast %cst_66 : f32 to vector<16x512xf32>
    %158 = arith.maximumf %157, %156 : vector<16x512xf32>
    %159 = vector.broadcast %cst_67 : f32 to vector<16x512xf32>
    %160 = arith.minimumf %159, %158 : vector<16x512xf32>
    %c0_68 = arith.constant 0 : index
    %c0_69 = arith.constant 0 : index
    %161 = vector.load %arg9[%c0_68, %c0_69] : memref<16x512xf32, #tpu.memory_space<vmem>>, vector<16x512xf32>
    tpu.vector_store %arg9[%c0_68, %c0_69], %160 {strides = array<i32>} : memref<16x512xf32, #tpu.memory_space<vmem>>, vector<16x512xf32>,
    return
  }
  func.func @transform_0(%arg0: i32) -> (i32, i32) {
    %c0_i32 = arith.constant 0 : i32
    %c0_i32_0 = arith.constant 0 : i32
    return %c0_i32, %arg0 : i32, i32
  }
  func.func @transform_1(%arg0: i32) -> (i32, i32) {
    %c0_i32 = arith.constant 0 : i32
    %c0_i32_0 = arith.constant 0 : i32
    %c0_i32_1 = arith.constant 0 : i32
    return %c0_i32, %c0_i32_0 : i32, i32
  }
  func.func @transform_2(%arg0: i32) -> (i32, i32) {
    %c0_i32 = arith.constant 0 : i32
    %c0_i32_0 = arith.constant 0 : i32
    %c0_i32_1 = arith.constant 0 : i32
    return %c0_i32, %c0_i32_0 : i32, i32
  }
  func.func @transform_3(%arg0: i32) -> (i32, i32) {
    %c0_i32 = arith.constant 0 : i32
    %c0_i32_0 = arith.constant 0 : i32
    %c0_i32_1 = arith.constant 0 : i32
    return %c0_i32, %c0_i32_0 : i32, i32
  }
  func.func @transform_4(%arg0: i32) -> (i32, i32) {
    %c0_i32 = arith.constant 0 : i32
    %c0_i32_0 = arith.constant 0 : i32
    %c0_i32_1 = arith.constant 0 : i32
    return %c0_i32, %c0_i32_0 : i32, i32
  }
  func.func @transform_5(%arg0: i32) -> (i32, i32) {
    %c0_i32 = arith.constant 0 : i32
    %c0_i32_0 = arith.constant 0 : i32
    %c0_i32_1 = arith.constant 0 : i32
    return %c0_i32, %c0_i32_0 : i32, i32
  }
  func.func @transform_6(%arg0: i32) -> (i32, i32) {
    %c0_i32 = arith.constant 0 : i32
    %c0_i32_0 = arith.constant 0 : i32
    %c0_i32_1 = arith.constant 0 : i32
    return %c0_i32, %c0_i32_0 : i32, i32
  }
  func.func @transform_7(%arg0: i32) -> (i32, i32) {
    %c0_i32 = arith.constant 0 : i32
    %c0_i32_0 = arith.constant 0 : i32
    %c0_i32_1 = arith.constant 0 : i32
    return %c0_i32, %c0_i32_0 : i32, i32
  }
  func.func @transform_8(%arg0: i32) -> (i32, i32) {
    %c0_i32 = arith.constant 0 : i32
    %c0_i32_0 = arith.constant 0 : i32
    return %c0_i32, %arg0 : i32, i32
  }
}

</mosaic_0001>

<llo_original>
// kernel: tpu_custom_call.1
$region0: #{tpu_custom_call.1}
  #allocation0 [shape = 'u32[]', space=smem, size = 0x4, offset = 0x4, fixed_abs, tag = 'smem constant byte address 0x4 - core index']
  #allocation1 [shape = 'u32[144,128]{1,0:T(1,128)}', space=vmem, size = 0x12000, scoped, tag = 'internal scratch']
  %s0 = inlined_call_operand.vmem [shape: bf16[16,512], index: 0, kind: input, shape index: {}]
  %s1 = inlined_call_operand.hbm [shape: f32[24,512], index: 1, kind: input, shape index: {}]
  %s2 = inlined_call_operand.vmem [shape: bf16[24,16], index: 2, kind: input, shape index: {}]
  %s3 = inlined_call_operand.vmem [shape: f32[24,1], index: 3, kind: input, shape index: {}]
  %s4 = inlined_call_operand.vmem [shape: bf16[16,216], index: 4, kind: input, shape index: {}]
  %s5 = inlined_call_operand.vmem [shape: f32[16,1], index: 5, kind: input, shape index: {}]
  %s6 = inlined_call_operand.vmem [shape: bf16[16,144], index: 6, kind: input, shape index: {}]
  %s7 = inlined_call_operand.vmem [shape: f32[16,1], index: 7, kind: input, shape index: {}]
  %s8 = inlined_call_operand.hbm [shape: f32[16,512], index: 8, kind: output, shape index: {}]
  %s9 = sld [smem:[#allocation0]]
  $region46: #{tpu_custom_call.1} parent=0
    _
  %s11 = ssub.s32 1, %s9
  %s12 = scalar_select 0, %s11, %s9
  $region1: #{tpu_custom_call.1} parent=0
    #allocation2 [shape = 'u8[49152]{0}', space=vmem, size = 0xc000, scoped, tag = 'input window, operand 1, single buffered']
    #allocation3 [shape = 's32[1]{0}', space=sflag, size = 0x4, scoped, tag = 'scoped memory for tpu_custom_call.1']
    #allocation4 [shape = 's32[1]{0}', space=sflag, size = 0x4, scoped, tag = 'scoped memory for tpu_custom_call.1']
    #allocation5 [shape = 'u8[32768]{0}', space=vmem, size = 0x8000, scoped, tag = 'output window, operand 0, single buffered']
    %13 = vsyncpa [#allocation3], 0
    %14 = vsyncpa [#allocation4], 0
    // Predicated region
    $region2: #{tpu_custom_call.1} parent=1 // pred_check
      _
    $region3: #{tpu_custom_call.1} parent=1 // pred_check_branch
      %16 = sbr.rel (0) target = $region5
    $region4: #{tpu_custom_call.1} parent=1 // pred_region
      _
    $region5: #{tpu_custom_call.1} parent=1 // pred_fallthru
      _
    // Predicated region
    $region6: #{tpu_custom_call.1} parent=1 // pred_check
      _
    $region7: #{tpu_custom_call.1} parent=1 // pred_check_branch
      %18 = sbr.rel (0) target = $region9
    $region8: #{tpu_custom_call.1} parent=1 // pred_region
      %s20 = ssub.s32 1536, 1536
      %21 = vsyncadd [#allocation3], %s20
      %s22 = sshll.u32 [#allocation2], 4
      %s23 = int_to_ptr.vmem [resolvable:$true] %s22
      %28 = dma.hbm_to_vmem [thread:$0]  %s1, 1536, %s23, [#allocation3], 512, 512, 32
    $region9: #{tpu_custom_call.1} parent=1 // pred_fallthru
      _
    // Predicated region
    $region10: #{tpu_custom_call.1} parent=1 // pred_check
      _
    $region11: #{tpu_custom_call.1} parent=1 // pred_check_branch
      %30 = sbr.rel (0) target = $region13
    $region12: #{tpu_custom_call.1} parent=1 // pred_region
      _
    $region13: #{tpu_custom_call.1} parent=1 // pred_fallthru
      _
    // Predicated region
    $region14: #{tpu_custom_call.1} parent=1 // pred_check
      _
    $region15: #{tpu_custom_call.1} parent=1 // pred_check_branch
      %32 = sbr.rel (0) target = $region17
    $region16: #{tpu_custom_call.1} parent=1 // pred_region
      _
    $region17: #{tpu_custom_call.1} parent=1 // pred_fallthru
      _
    // Predicated region
    $region18: #{tpu_custom_call.1} parent=1 // pred_check
      _
    $region19: #{tpu_custom_call.1} parent=1 // pred_check_branch
      %34 = sbr.rel (0) target = $region21
    $region20: #{tpu_custom_call.1} parent=1 // pred_region
      _
    $region21: #{tpu_custom_call.1} parent=1 // pred_fallthru
      _
    // Predicated region
    $region22: #{tpu_custom_call.1} parent=1 // pred_check
      _
    $region23: #{tpu_custom_call.1} parent=1 // pred_check_branch
      %36 = sbr.rel (0) target = $region25
    $region24: #{tpu_custom_call.1} parent=1 // pred_region
      _
    $region25: #{tpu_custom_call.1} parent=1 // pred_fallthru
      _
    // Predicated region
    $region26: #{tpu_custom_call.1} parent=1 // pred_check
      _
    $region27: #{tpu_custom_call.1} parent=1 // pred_check_branch
      %38 = sbr.rel (0) target = $region29
    $region28: #{tpu_custom_call.1} parent=1 // pred_region
      _
    $region29: #{tpu_custom_call.1} parent=1 // pred_fallthru
      _
    // Predicated region
    $region30: #{tpu_custom_call.1} parent=1 // pred_check
      _
    $region31: #{tpu_custom_call.1} parent=1 // pred_check_branch
      %40 = sbr.rel (0) target = $region33
    $region32: #{tpu_custom_call.1} parent=1 // pred_region
      _
    $region33: #{tpu_custom_call.1} parent=1 // pred_fallthru
      _
    // Predicated region
    $region34: #{tpu_custom_call.1} parent=1 // pred_check
      _
    $region35: #{tpu_custom_call.1} parent=1 // pred_check_branch
      %42 = sbr.rel (0) target = $region37
    $region36: #{tpu_custom_call.1} parent=1 // pred_region
      %43 = dma.done [#allocation3], 1536
    $region37: #{tpu_custom_call.1} parent=1 // pred_fallthru
      _
    %v45 = vld [vmem:[%s0] sm:$0xff]
    %v46 = vld [vmem:[%s0 + $0x8] sm:$0xff]
    %v47 = vld [vmem:[%s0 + $0x10] sm:$0xff]
    %v48 = vld [vmem:[%s0 + $0x18] sm:$0xff]
    %v49 = vld [vmem:[%s2] sm:$0xf]
    %v50 = vld [vmem:[%s2 + $0x4] sm:$0xf]
    %v51 = vld [vmem:[%s2 + $0x8] sm:$0xf]
    %v52 = vld [vmem:[%s3] sm:$0xff]
    %v53 = vld [vmem:[%s3 + $0x8] sm:$0xff]
    %v54 = vld [vmem:[%s3 + $0x10] sm:$0xff]
    %56 = vset.pattern.permute.xlu0 0
    %57 = vperm.xlu0 %56, %v52
    %v58 = vpop.permute.xlu0 %57
    %61 = vset.pattern.permute.xlu0 0
    %62 = vperm.xlu0 %61, %v53
    %v63 = vpop.permute.xlu0 %62
    %66 = vset.pattern.permute.xlu0 0
    %67 = vperm.xlu0 %66, %v54
    %v68 = vpop.permute.xlu0 %67
    %v73 = vunpack.c.l.b16 %v49
    %v74 = vunpack.c.l.b16 %v50
    %v75 = vunpack.c.l.b16 %v51
    %v76 = vpack.c.b16 %v74, %v73
    %v77 = vpack.c.b16 %v75, %v75
    %v82 = vunpack.c.l.b16 %v45
    %v83 = vunpack.c.h.b16 %v45
    %v84 = vunpack.c.l.b16 %v46
    %v85 = vunpack.c.h.b16 %v46
    %v86 = vunpack.c.l.b16 %v47
    %v87 = vunpack.c.h.b16 %v47
    %v88 = vunpack.c.l.b16 %v48
    %v89 = vunpack.c.h.b16 %v48
    %v90 = vpack.c.b16 %v86, %v82
    %v91 = vpack.c.b16 %v87, %v83
    %v92 = vpack.c.b16 %v88, %v84
    %v93 = vpack.c.b16 %v89, %v85
    %vm98 = vcmask 130048
    %v100 = vsel %vm98, %v76, 0
    %v103 = vsel %vm98, %v77, 0
    %105 = vmatprep.subr.bf16.mxu0 %v91
    %106 = vmatpush1.bf16.msra.mxu0 %v90
    %107 = vmatprep.subr.bf16.mxu0 0
    %108 = vmatpush1.bf16.msra.mxu0 0
    %109 = vmatprep.subr.bf16.mxu0 0
    %110 = vmatpush1.bf16.msra.mxu0 0
    %111 = vmatprep.subr.bf16.mxu0 0
    %112 = vmatpush1.bf16.msra.mxu0 0
    %113 = vmatprep.subr.bf16.mxu0 0
    %114 = vmatpush1.bf16.msra.mxu0 0
    %115 = vmatprep.subr.bf16.mxu0 0
    %116 = vmatpush1.bf16.msra.mxu0 0
    %117 = vmatprep.subr.bf16.mxu0 0
    %118 = vmatpush1.bf16.msra.mxu0 0
    %119 = vmatprep.subr.bf16.mxu0 0
    %120 = vmatpush1.bf16.msra.mxu0 0
    %121 = vmatprep.subr.bf16.mxu0 0
    %122 = vmatpush1.bf16.msra.mxu0 0
    %123 = vmatprep.subr.bf16.mxu0 0
    %124 = vmatpush1.bf16.msra.mxu0 0
    %125 = vmatprep.subr.bf16.mxu0 0
    %126 = vmatpush1.bf16.msra.mxu0 0
    %127 = vmatprep.subr.bf16.mxu0 0
    %128 = vmatpush1.bf16.msra.mxu0 0
    %129 = vmatprep.subr.bf16.mxu0 0
    %130 = vmatpush1.bf16.msra.mxu0 0
    %131 = vmatprep.subr.bf16.mxu0 0
    %132 = vmatpush1.bf16.msra.mxu0 0
    %133 = vmatprep.subr.bf16.mxu0 0
    %134 = vmatpush1.bf16.msra.mxu0 0
    %135 = vmatprep.subr.bf16.mxu0 0
    %136 = vmatpush1.bf16.msra.mxu0 0
    %137 = vmatprep.mubr.bf16.mxu0 0
    %138 = vmatmul.mubr.bf16.gmra.mrb[0].mxu0 %v100
    %v139 = vpop.f32.mrb[0].mxu0
    %v140 = vadd.f32 %v58, %v139
    %v141 = vpop.f32.mrb[0].mxu0
    %v142 = vadd.f32 %v58, %v141
    %v143 = vpop.f32.mrb[0].mxu0
    %v144 = vadd.f32 %v63, %v143
    %v145 = vpop.f32.mrb[0].mxu0
    %v146 = vadd.f32 %v63, %v145
    %147 = vmatprep.mubr.bf16.mxu0 0
    %148 = vmatmul.mubr.bf16.gmra.mrb[0].mxu0 %v103
    %v149 = vpop.f32.mrb[0].mxu0
    %v150 = vadd.f32 %v68, %v149
    %v151 = vpop.f32.mrb[0].mxu0
    %v152 = vadd.f32 %v68, %v151
    %v153 = vpop.f32.mrb[0].mxu0
    %v154 = vpop.f32.mrb[0].mxu0
    %155 = vdwg.mxu0
    %156 = vmatprep.subr.bf16.mxu0 %v93
    %157 = vmatpush1.bf16.msra.mxu0 %v92
    %158 = vmatprep.subr.bf16.mxu0 0
    %159 = vmatpush1.bf16.msra.mxu0 0
    %160 = vmatprep.subr.bf16.mxu0 0
    %161 = vmatpush1.bf16.msra.mxu0 0
    %162 = vmatprep.subr.bf16.mxu0 0
    %163 = vmatpush1.bf16.msra.mxu0 0
    %164 = vmatprep.subr.bf16.mxu0 0
    %165 = vmatpush1.bf16.msra.mxu0 0
    %166 = vmatprep.subr.bf16.mxu0 0
    %167 = vmatpush1.bf16.msra.mxu0 0
    %168 = vmatprep.subr.bf16.mxu0 0
    %169 = vmatpush1.bf16.msra.mxu0 0
    %170 = vmatprep.subr.bf16.mxu0 0
    %171 = vmatpush1.bf16.msra.mxu0 0
    %172 = vmatprep.subr.bf16.mxu0 0
    %173 = vmatpush1.bf16.msra.mxu0 0
    %174 = vmatprep.subr.bf16.mxu0 0
    %175 = vmatpush1.bf16.msra.mxu0 0
    %176 = vmatprep.subr.bf16.mxu0 0
    %177 = vmatpush1.bf16.msra.mxu0 0
    %178 = vmatprep.subr.bf16.mxu0 0
    %179 = vmatpush1.bf16.msra.mxu0 0
    %180 = vmatprep.subr.bf16.mxu0 0
    %181 = vmatpush1.bf16.msra.mxu0 0
    %182 = vmatprep.subr.bf16.mxu0 0
    %183 = vmatpush1.bf16.msra.mxu0 0
    %184 = vmatprep.subr.bf16.mxu0 0
    %185 = vmatpush1.bf16.msra.mxu0 0
    %186 = vmatprep.subr.bf16.mxu0 0
    %187 = vmatpush1.bf16.msra.mxu0 0
    %188 = vmatprep.mubr.bf16.mxu0 0
    %189 = vmatmul.mubr.bf16.gmra.mrb[0].mxu0 %v100
    %v190 = vpop.f32.mrb[0].mxu0
    %v191 = vadd.f32 %v58, %v190
    %v192 = vpop.f32.mrb[0].mxu0
    %v193 = vadd.f32 %v58, %v192
    %v194 = vpop.f32.mrb[0].mxu0
    %v195 = vadd.f32 %v63, %v194
    %v196 = vpop.f32.mrb[0].mxu0
    %v197 = vadd.f32 %v63, %v196
    %198 = vmatprep.mubr.bf16.mxu0 0
    %199 = vmatmul.mubr.bf16.gmra.mrb[0].mxu0 %v103
    %v200 = vpop.f32.mrb[0].mxu0
    %v201 = vadd.f32 %v68, %v200
    %v202 = vpop.f32.mrb[0].mxu0
    %v203 = vadd.f32 %v68, %v202
    %v204 = vpop.f32.mrb[0].mxu0
    %v205 = vpop.f32.mrb[0].mxu0
    %206 = vdwg.mxu0
    %207 = vrot.lane.b32.xlu0 %v140, 17
    %v208 = vpop.permute.xlu0 %207
    %209 = vrot.lane.b32.xlu0 %v142, 17
    %v210 = vpop.permute.xlu0 %209
    %211 = vrot.lane.b32.xlu0 %v191, 17
    %v212 = vpop.permute.xlu0 %211
    %213 = vrot.lane.b32.xlu0 %v193, 17
    %v214 = vpop.permute.xlu0 %213
    %v215 = vlaneseq
    %v216 = vand.u32 %v215, 127
    %vm217 = vcmp.lt.s32.totalorder %v216, 17
    %v218 = vsel %vm217, %v212, %v214
    %v219 = vsel %vm217, %v210, %v212
    %v220 = vsel %vm217, %v208, %v210
    %v221 = vsel %vm217, %v214, %v208
    %v222 = vld [vmem:[#allocation2] ss:$8 sm:$0xf]
    %v224 = vlaneseq
    %v225 = vshrl.u32 %v224, 7
    %v226 = vsub.s32 0, %v225
    %v227 = vrot.slane %v222, %v226
    %v228 = vlaneseq
    %v229 = vshrl.u32 %v228, 7
    %v230 = vsub.s32 1, %v229
    %v231 = vrot.slane %v222, %v230
    %v232 = vlaneseq
    %v233 = vshrl.u32 %v232, 7
    %v234 = vsub.s32 2, %v233
    %v235 = vrot.slane %v222, %v234
    %v236 = vlaneseq
    %v237 = vshrl.u32 %v236, 7
    %v238 = vsub.s32 3, %v237
    %v239 = vrot.slane %v222, %v238
    %v244 = vmul.f32 %v221, %v227
    %v245 = vmul.f32 %v220, %v231
    %v246 = vmul.f32 %v219, %v235
    %v247 = vmul.f32 %v218, %v239
    %248 = vrot.lane.b32.xlu0 %v144, 34
    %v249 = vpop.permute.xlu0 %248
    %250 = vrot.lane.b32.xlu0 %v146, 34
    %v251 = vpop.permute.xlu0 %250
    %252 = vrot.lane.b32.xlu0 %v195, 34
    %v253 = vpop.permute.xlu0 %252
    %254 = vrot.lane.b32.xlu0 %v197, 34
    %v255 = vpop.permute.xlu0 %254
    %vm256 = vcmp.lt.s32.totalorder %v216, 34
    %v257 = vsel %vm256, %v253, %v255
    %v258 = vsel %vm256, %v251, %v253
    %v259 = vsel %vm256, %v249, %v251
    %v260 = vsel %vm256, %v255, %v249
    %s261 = scalar_lea.vmem [#allocation2], 32
    %v262 = vld [vmem:[%s261] ss:$8 sm:$0xf]
    %v264 = vlaneseq
    %v265 = vshrl.u32 %v264, 7
    %v266 = vsub.s32 0, %v265
    %v267 = vrot.slane %v262, %v266
    %v268 = vlaneseq
    %v269 = vshrl.u32 %v268, 7
    %v270 = vsub.s32 1, %v269
    %v271 = vrot.slane %v262, %v270
    %v272 = vlaneseq
    %v273 = vshrl.u32 %v272, 7
    %v274 = vsub.s32 2, %v273
    %v275 = vrot.slane %v262, %v274
    %v276 = vlaneseq
    %v277 = vshrl.u32 %v276, 7
    %v278 = vsub.s32 3, %v277
    %v279 = vrot.slane %v262, %v278
    %v284 = vmul.f32 %v260, %v267
    %v285 = vmul.f32 %v259, %v271
    %v286 = vmul.f32 %v258, %v275
    %v287 = vmul.f32 %v257, %v279
    %288 = vrot.lane.b32.xlu0 %v150, 51
    %v289 = vpop.permute.xlu0 %288
    %290 = vrot.lane.b32.xlu0 %v152, 51
    %v291 = vpop.permute.xlu0 %290
    %292 = vrot.lane.b32.xlu0 %v201, 51
    %v293 = vpop.permute.xlu0 %292
    %294 = vrot.lane.b32.xlu0 %v203, 51
    %v295 = vpop.permute.xlu0 %294
    %vm296 = vcmp.lt.s32.totalorder %v216, 51
    %v297 = vsel %vm296, %v293, %v295
    %v298 = vsel %vm296, %v291, %v293
    %v299 = vsel %vm296, %v289, %v291
    %v300 = vsel %vm296, %v295, %v289
    %s301 = scalar_lea.vmem [#allocation2], 64
    %v302 = vld [vmem:[%s301] ss:$8 sm:$0xf]
    %v304 = vlaneseq
    %v305 = vshrl.u32 %v304, 7
    %v306 = vsub.s32 0, %v305
    %v307 = vrot.slane %v302, %v306
    %v308 = vlaneseq
    %v309 = vshrl.u32 %v308, 7
    %v310 = vsub.s32 1, %v309
    %v311 = vrot.slane %v302, %v310
    %v312 = vlaneseq
    %v313 = vshrl.u32 %v312, 7
    %v314 = vsub.s32 2, %v313
    %v315 = vrot.slane %v302, %v314
    %v316 = vlaneseq
    %v317 = vshrl.u32 %v316, 7
    %v318 = vsub.s32 3, %v317
    %v319 = vrot.slane %v302, %v318
    %v324 = vmul.f32 %v300, %v307
    %v325 = vmul.f32 %v299, %v311
    %v326 = vmul.f32 %v298, %v315
    %v327 = vmul.f32 %v297, %v319
    %328 = vrot.lane.b32.xlu0 %v140, 16
    %v329 = vpop.permute.xlu0 %328
    %330 = vrot.lane.b32.xlu0 %v142, 16
    %v331 = vpop.permute.xlu0 %330
    %332 = vrot.lane.b32.xlu0 %v191, 16
    %v333 = vpop.permute.xlu0 %332
    %334 = vrot.lane.b32.xlu0 %v193, 16
    %v335 = vpop.permute.xlu0 %334
    %vm336 = vcmp.lt.s32.totalorder %v216, 16
    %v337 = vsel %vm336, %v333, %v335
    %v338 = vsel %vm336, %v331, %v333
    %v339 = vsel %vm336, %v329, %v331
    %v340 = vsel %vm336, %v335, %v329
    %s341 = scalar_lea.vmem [#allocation2], 1
    %v342 = vld [vmem:[%s341] ss:$8 sm:$0xf]
    %v344 = vlaneseq
    %v345 = vshrl.u32 %v344, 7
    %v346 = vsub.s32 0, %v345
    %v347 = vrot.slane %v342, %v346
    %v348 = vlaneseq
    %v349 = vshrl.u32 %v348, 7
    %v350 = vsub.s32 1, %v349
    %v351 = vrot.slane %v342, %v350
    %v352 = vlaneseq
    %v353 = vshrl.u32 %v352, 7
    %v354 = vsub.s32 2, %v353
    %v355 = vrot.slane %v342, %v354
    %v356 = vlaneseq
    %v357 = vshrl.u32 %v356, 7
    %v358 = vsub.s32 3, %v357
    %v359 = vrot.slane %v342, %v358
    %v364 = vmul.f32 %v340, %v347
    %v365 = vmul.f32 %v339, %v351
    %v366 = vmul.f32 %v338, %v355
    %v367 = vmul.f32 %v337, %v359
    %368 = vrot.lane.b32.xlu0 %v144, 32
    %v369 = vpop.permute.xlu0 %368
    %370 = vrot.lane.b32.xlu0 %v146, 32
    %v371 = vpop.permute.xlu0 %370
    %372 = vrot.lane.b32.xlu0 %v195, 32
    %v373 = vpop.permute.xlu0 %372
    %374 = vrot.lane.b32.xlu0 %v197, 32
    %v375 = vpop.permute.xlu0 %374
    %vm376 = vcmp.lt.s32.totalorder %v216, 32
    %v377 = vsel %vm376, %v373, %v375
    %v378 = vsel %vm376, %v371, %v373
    %v379 = vsel %vm376, %v369, %v371
    %v380 = vsel %vm376, %v375, %v369
    %s381 = scalar_lea.vmem [#allocation2], 33
    %v382 = vld [vmem:[%s381] ss:$8 sm:$0xf]
    %v384 = vlaneseq
    %v385 = vshrl.u32 %v384, 7
    %v386 = vsub.s32 0, %v385
    %v387 = vrot.slane %v382, %v386
    %v388 = vlaneseq
    %v389 = vshrl.u32 %v388, 7
    %v390 = vsub.s32 1, %v389
    %v391 = vrot.slane %v382, %v390
    %v392 = vlaneseq
    %v393 = vshrl.u32 %v392, 7
    %v394 = vsub.s32 2, %v393
    %v395 = vrot.slane %v382, %v394
    %v396 = vlaneseq
    %v397 = vshrl.u32 %v396, 7
    %v398 = vsub.s32 3, %v397
    %v399 = vrot.slane %v382, %v398
    %v404 = vmul.f32 %v380, %v387
    %v405 = vmul.f32 %v379, %v391
    %v406 = vmul.f32 %v378, %v395
    %v407 = vmul.f32 %v377, %v399
    %408 = vrot.lane.b32.xlu0 %v150, 48
    %v409 = vpop.permute.xlu0 %408
    %410 = vrot.lane.b32.xlu0 %v152, 48
    %v411 = vpop.permute.xlu0 %410
    %412 = vrot.lane.b32.xlu0 %v201, 48
    %v413 = vpop.permute.xlu0 %412
    %414 = vrot.lane.b32.xlu0 %v203, 48
    %v415 = vpop.permute.xlu0 %414
    %vm416 = vcmp.lt.s32.totalorder %v216, 48
    %v417 = vsel %vm416, %v413, %v415
    %v418 = vsel %vm416, %v411, %v413
    %v419 = vsel %vm416, %v409, %v411
    %v420 = vsel %vm416, %v415, %v409
    %s421 = scalar_lea.vmem [#allocation2], 65
    %v422 = vld [vmem:[%s421] ss:$8 sm:$0xf]
    %v424 = vlaneseq
    %v425 = vshrl.u32 %v424, 7
    %v426 = vsub.s32 0, %v425
    %v427 = vrot.slane %v422, %v426
    %v428 = vlaneseq
    %v429 = vshrl.u32 %v428, 7
    %v430 = vsub.s32 1, %v429
    %v431 = vrot.slane %v422, %v430
    %v432 = vlaneseq
    %v433 = vshrl.u32 %v432, 7
    %v434 = vsub.s32 2, %v433
    %v435 = vrot.slane %v422, %v434
    %v436 = vlaneseq
    %v437 = vshrl.u32 %v436, 7
    %v438 = vsub.s32 3, %v437
    %v439 = vrot.slane %v422, %v438
    %v444 = vmul.f32 %v420, %v427
    %v445 = vmul.f32 %v419, %v431
    %v446 = vmul.f32 %v418, %v435
    %v447 = vmul.f32 %v417, %v439
    %448 = vrot.lane.b32.xlu0 %v140, 15
    %v449 = vpop.permute.xlu0 %448
    %450 = vrot.lane.b32.xlu0 %v142, 15
    %v451 = vpop.permute.xlu0 %450
    %452 = vrot.lane.b32.xlu0 %v191, 15
    %v453 = vpop.permute.xlu0 %452
    %454 = vrot.lane.b32.xlu0 %v193, 15
    %v455 = vpop.permute.xlu0 %454
    %vm456 = vcmp.lt.s32.totalorder %v216, 15
    %v457 = vsel %vm456, %v453, %v455
    %v458 = vsel %vm456, %v451, %v453
    %v459 = vsel %vm456, %v449, %v451
    %v460 = vsel %vm456, %v455, %v449
    %s461 = scalar_lea.vmem [#allocation2], 2
    %v462 = vld [vmem:[%s461] ss:$8 sm:$0xf]
    %v464 = vlaneseq
    %v465 = vshrl.u32 %v464, 7
    %v466 = vsub.s32 0, %v465
    %v467 = vrot.slane %v462, %v466
    %v468 = vlaneseq
    %v469 = vshrl.u32 %v468, 7
    %v470 = vsub.s32 1, %v469
    %v471 = vrot.slane %v462, %v470
    %v472 = vlaneseq
    %v473 = vshrl.u32 %v472, 7
    %v474 = vsub.s32 2, %v473
    %v475 = vrot.slane %v462, %v474
    %v476 = vlaneseq
    %v477 = vshrl.u32 %v476, 7
    %v478 = vsub.s32 3, %v477
    %v479 = vrot.slane %v462, %v478
    %v484 = vmul.f32 %v460, %v467
    %v485 = vmul.f32 %v459, %v471
    %v486 = vmul.f32 %v458, %v475
    %v487 = vmul.f32 %v457, %v479
    %488 = vrot.lane.b32.xlu0 %v144, 30
    %v489 = vpop.permute.xlu0 %488
    %490 = vrot.lane.b32.xlu0 %v146, 30
    %v491 = vpop.permute.xlu0 %490
    %492 = vrot.lane.b32.xlu0 %v195, 30
    %v493 = vpop.permute.xlu0 %492
    %494 = vrot.lane.b32.xlu0 %v197, 30
    %v495 = vpop.permute.xlu0 %494
    %vm496 = vcmp.lt.s32.totalorder %v216, 30
    %v497 = vsel %vm496, %v493, %v495
    %v498 = vsel %vm496, %v491, %v493
    %v499 = vsel %vm496, %v489, %v491
    %v500 = vsel %vm496, %v495, %v489
    %s501 = scalar_lea.vmem [#allocation2], 34
    %v502 = vld [vmem:[%s501] ss:$8 sm:$0xf]
    %v504 = vlaneseq
    %v505 = vshrl.u32 %v504, 7
    %v506 = vsub.s32 0, %v505
    %v507 = vrot.slane %v502, %v506
    %v508 = vlaneseq
    %v509 = vshrl.u32 %v508, 7
    %v510 = vsub.s32 1, %v509
    %v511 = vrot.slane %v502, %v510
    %v512 = vlaneseq
    %v513 = vshrl.u32 %v512, 7
    %v514 = vsub.s32 2, %v513
    %v515 = vrot.slane %v502, %v514
    %v516 = vlaneseq
    %v517 = vshrl.u32 %v516, 7
    %v518 = vsub.s32 3, %v517
    %v519 = vrot.slane %v502, %v518
    %v524 = vmul.f32 %v500, %v507
    %v525 = vmul.f32 %v499, %v511
    %v526 = vmul.f32 %v498, %v515
    %v527 = vmul.f32 %v497, %v519
    %528 = vrot.lane.b32.xlu0 %v150, 45
    %v529 = vpop.permute.xlu0 %528
    %530 = vrot.lane.b32.xlu0 %v152, 45
    %v531 = vpop.permute.xlu0 %530
    %532 = vrot.lane.b32.xlu0 %v201, 45
    %v533 = vpop.permute.xlu0 %532
    %534 = vrot.lane.b32.xlu0 %v203, 45
    %v535 = vpop.permute.xlu0 %534
    %vm536 = vcmp.lt.s32.totalorder %v216, 45
    %v537 = vsel %vm536, %v533, %v535
    %v538 = vsel %vm536, %v531, %v533
    %v539 = vsel %vm536, %v529, %v531
    %v540 = vsel %vm536, %v535, %v529
    %s541 = scalar_lea.vmem [#allocation2], 66
    %v542 = vld [vmem:[%s541] ss:$8 sm:$0xf]
    %v544 = vlaneseq
    %v545 = vshrl.u32 %v544, 7
    %v546 = vsub.s32 0, %v545
    %v547 = vrot.slane %v542, %v546
    %v548 = vlaneseq
    %v549 = vshrl.u32 %v548, 7
    %v550 = vsub.s32 1, %v549
    %v551 = vrot.slane %v542, %v550
    %v552 = vlaneseq
    %v553 = vshrl.u32 %v552, 7
    %v554 = vsub.s32 2, %v553
    %v555 = vrot.slane %v542, %v554
    %v556 = vlaneseq
    %v557 = vshrl.u32 %v556, 7
    %v558 = vsub.s32 3, %v557
    %v559 = vrot.slane %v542, %v558
    %v564 = vmul.f32 %v540, %v547
    %v565 = vmul.f32 %v539, %v551
    %v566 = vmul.f32 %v538, %v555
    %v567 = vmul.f32 %v537, %v559
    %568 = vrot.lane.b32.xlu0 %v140, 1
    %v569 = vpop.permute.xlu0 %568
    %570 = vrot.lane.b32.xlu0 %v142, 1
    %v571 = vpop.permute.xlu0 %570
    %572 = vrot.lane.b32.xlu0 %v191, 1
    %v573 = vpop.permute.xlu0 %572
    %574 = vrot.lane.b32.xlu0 %v193, 1
    %v575 = vpop.permute.xlu0 %574
    %vm576 = vcmp.lt.s32.totalorder %v216, 1
    %v577 = vsel %vm576, %v573, %v575
    %v578 = vsel %vm576, %v571, %v573
    %v579 = vsel %vm576, %v569, %v571
    %v580 = vsel %vm576, %v575, %v569
    %s581 = scalar_lea.vmem [#allocation2], 3
    %v582 = vld [vmem:[%s581] ss:$8 sm:$0xf]
    %v584 = vlaneseq
    %v585 = vshrl.u32 %v584, 7
    %v586 = vsub.s32 0, %v585
    %v587 = vrot.slane %v582, %v586
    %v588 = vlaneseq
    %v589 = vshrl.u32 %v588, 7
    %v590 = vsub.s32 1, %v589
    %v591 = vrot.slane %v582, %v590
    %v592 = vlaneseq
    %v593 = vshrl.u32 %v592, 7
    %v594 = vsub.s32 2, %v593
    %v595 = vrot.slane %v582, %v594
    %v596 = vlaneseq
    %v597 = vshrl.u32 %v596, 7
    %v598 = vsub.s32 3, %v597
    %v599 = vrot.slane %v582, %v598
    %v604 = vmul.f32 %v580, %v587
    %v605 = vmul.f32 %v579, %v591
    %v606 = vmul.f32 %v578, %v595
    %v607 = vmul.f32 %v577, %v599
    %608 = vrot.lane.b32.xlu0 %v144, 2
    %v609 = vpop.permute.xlu0 %608
    %610 = vrot.lane.b32.xlu0 %v146, 2
    %v611 = vpop.permute.xlu0 %610
    %612 = vrot.lane.b32.xlu0 %v195, 2
    %v613 = vpop.permute.xlu0 %612
    %614 = vrot.lane.b32.xlu0 %v197, 2
    %v615 = vpop.permute.xlu0 %614
    %vm616 = vcmp.lt.s32.totalorder %v216, 2
    %v617 = vsel %vm616, %v613, %v615
    %v618 = vsel %vm616, %v611, %v613
    %v619 = vsel %vm616, %v609, %v611
    %v620 = vsel %vm616, %v615, %v609
    %s621 = scalar_lea.vmem [#allocation2], 35
    %v622 = vld [vmem:[%s621] ss:$8 sm:$0xf]
    %v624 = vlaneseq
    %v625 = vshrl.u32 %v624, 7
    %v626 = vsub.s32 0, %v625
    %v627 = vrot.slane %v622, %v626
    %v628 = vlaneseq
    %v629 = vshrl.u32 %v628, 7
    %v630 = vsub.s32 1, %v629
    %v631 = vrot.slane %v622, %v630
    %v632 = vlaneseq
    %v633 = vshrl.u32 %v632, 7
    %v634 = vsub.s32 2, %v633
    %v635 = vrot.slane %v622, %v634
    %v636 = vlaneseq
    %v637 = vshrl.u32 %v636, 7
    %v638 = vsub.s32 3, %v637
    %v639 = vrot.slane %v622, %v638
    %v644 = vmul.f32 %v620, %v627
    %v645 = vmul.f32 %v619, %v631
    %v646 = vmul.f32 %v618, %v635
    %v647 = vmul.f32 %v617, %v639
    %648 = vrot.lane.b32.xlu0 %v150, 3
    %v649 = vpop.permute.xlu0 %648
    %650 = vrot.lane.b32.xlu0 %v152, 3
    %v651 = vpop.permute.xlu0 %650
    %652 = vrot.lane.b32.xlu0 %v201, 3
    %v653 = vpop.permute.xlu0 %652
    %654 = vrot.lane.b32.xlu0 %v203, 3
    %v655 = vpop.permute.xlu0 %654
    %vm656 = vcmp.lt.s32.totalorder %v216, 3
    %v657 = vsel %vm656, %v653, %v655
    %v658 = vsel %vm656, %v651, %v653
    %v659 = vsel %vm656, %v649, %v651
    %v660 = vsel %vm656, %v655, %v649
    %s661 = scalar_lea.vmem [#allocation2], 67
    %v662 = vld [vmem:[%s661] ss:$8 sm:$0xf]
    %v664 = vlaneseq
    %v665 = vshrl.u32 %v664, 7
    %v666 = vsub.s32 0, %v665
    %v667 = vrot.slane %v662, %v666
    %v668 = vlaneseq
    %v669 = vshrl.u32 %v668, 7
    %v670 = vsub.s32 1, %v669
    %v671 = vrot.slane %v662, %v670
    %v672 = vlaneseq
    %v673 = vshrl.u32 %v672, 7
    %v674 = vsub.s32 2, %v673
    %v675 = vrot.slane %v662, %v674
    %v676 = vlaneseq
    %v677 = vshrl.u32 %v676, 7
    %v678 = vsub.s32 3, %v677
    %v679 = vrot.slane %v662, %v678
    %v684 = vmul.f32 %v660, %v667
    %v685 = vmul.f32 %v659, %v671
    %v686 = vmul.f32 %v658, %v675
    %v687 = vmul.f32 %v657, %v679
    %688 = vrot.lane.b32.xlu0 %v140, 127
    %v689 = vpop.permute.xlu0 %688
    %690 = vrot.lane.b32.xlu0 %v142, 127
    %v691 = vpop.permute.xlu0 %690
    %692 = vrot.lane.b32.xlu0 %v191, 127
    %v693 = vpop.permute.xlu0 %692
    %694 = vrot.lane.b32.xlu0 %v193, 127
    %v695 = vpop.permute.xlu0 %694
    %vm696 = vcmp.lt.s32.totalorder %v216, 127
    %v697 = vsel %vm696, %v693, %v695
    %v698 = vsel %vm696, %v691, %v693
    %v699 = vsel %vm696, %v689, %v691
    %v700 = vsel %vm696, %v695, %v689
    %s701 = scalar_lea.vmem [#allocation2], 4
    %v702 = vld [vmem:[%s701] ss:$8 sm:$0xf]
    %v704 = vlaneseq
    %v705 = vshrl.u32 %v704, 7
    %v706 = vsub.s32 0, %v705
    %v707 = vrot.slane %v702, %v706
    %v708 = vlaneseq
    %v709 = vshrl.u32 %v708, 7
    %v710 = vsub.s32 1, %v709
    %v711 = vrot.slane %v702, %v710
    %v712 = vlaneseq
    %v713 = vshrl.u32 %v712, 7
    %v714 = vsub.s32 2, %v713
    %v715 = vrot.slane %v702, %v714
    %v716 = vlaneseq
    %v717 = vshrl.u32 %v716, 7
    %v718 = vsub.s32 3, %v717
    %v719 = vrot.slane %v702, %v718
    %v724 = vmul.f32 %v699, %v707
    %v725 = vmul.f32 %v698, %v711
    %v726 = vmul.f32 %v697, %v715
    %v727 = vmul.f32 %v700, %v719
    %728 = vrot.lane.b32.xlu0 %v144, 126
    %v729 = vpop.permute.xlu0 %728
    %730 = vrot.lane.b32.xlu0 %v146, 126
    %v731 = vpop.permute.xlu0 %730
    %732 = vrot.lane.b32.xlu0 %v195, 126
    %v733 = vpop.permute.xlu0 %732
    %734 = vrot.lane.b32.xlu0 %v197, 126
    %v735 = vpop.permute.xlu0 %734
    %vm736 = vcmp.lt.s32.totalorder %v216, 126
    %v737 = vsel %vm736, %v733, %v735
    %v738 = vsel %vm736, %v731, %v733
    %v739 = vsel %vm736, %v729, %v731
    %v740 = vsel %vm736, %v735, %v729
    %s741 = scalar_lea.vmem [#allocation2], 36
    %v742 = vld [vmem:[%s741] ss:$8 sm:$0xf]
    %v744 = vlaneseq
    %v745 = vshrl.u32 %v744, 7
    %v746 = vsub.s32 0, %v745
    %v747 = vrot.slane %v742, %v746
    %v748 = vlaneseq
    %v749 = vshrl.u32 %v748, 7
    %v750 = vsub.s32 1, %v749
    %v751 = vrot.slane %v742, %v750
    %v752 = vlaneseq
    %v753 = vshrl.u32 %v752, 7
    %v754 = vsub.s32 2, %v753
    %v755 = vrot.slane %v742, %v754
    %v756 = vlaneseq
    %v757 = vshrl.u32 %v756, 7
    %v758 = vsub.s32 3, %v757
    %v759 = vrot.slane %v742, %v758
    %v764 = vmul.f32 %v739, %v747
    %v765 = vmul.f32 %v738, %v751
    %v766 = vmul.f32 %v737, %v755
    %v767 = vmul.f32 %v740, %v759
    %768 = vrot.lane.b32.xlu0 %v150, 125
    %v769 = vpop.permute.xlu0 %768
    %770 = vrot.lane.b32.xlu0 %v152, 125
    %v771 = vpop.permute.xlu0 %770
    %772 = vrot.lane.b32.xlu0 %v201, 125
    %v773 = vpop.permute.xlu0 %772
    %774 = vrot.lane.b32.xlu0 %v203, 125
    %v775 = vpop.permute.xlu0 %774
    %vm776 = vcmp.lt.s32.totalorder %v216, 125
    %v777 = vsel %vm776, %v773, %v775
    %v778 = vsel %vm776, %v771, %v773
    %v779 = vsel %vm776, %v769, %v771
    %v780 = vsel %vm776, %v775, %v769
    %s781 = scalar_lea.vmem [#allocation2], 68
    %v782 = vld [vmem:[%s781] ss:$8 sm:$0xf]
    %v784 = vlaneseq
    %v785 = vshrl.u32 %v784, 7
    %v786 = vsub.s32 0, %v785
    %v787 = vrot.slane %v782, %v786
    %v788 = vlaneseq
    %v789 = vshrl.u32 %v788, 7
    %v790 = vsub.s32 1, %v789
    %v791 = vrot.slane %v782, %v790
    %v792 = vlaneseq
    %v793 = vshrl.u32 %v792, 7
    %v794 = vsub.s32 2, %v793
    %v795 = vrot.slane %v782, %v794
    %v796 = vlaneseq
    %v797 = vshrl.u32 %v796, 7
    %v798 = vsub.s32 3, %v797
    %v799 = vrot.slane %v782, %v798
    %v804 = vmul.f32 %v779, %v787
    %v805 = vmul.f32 %v778, %v791
    %v806 = vmul.f32 %v777, %v795
    %v807 = vmul.f32 %v780, %v799
    %808 = vrot.lane.b32.xlu0 %v140, 113
    %v809 = vpop.permute.xlu0 %808
    %810 = vrot.lane.b32.xlu0 %v142, 113
    %v811 = vpop.permute.xlu0 %810
    %812 = vrot.lane.b32.xlu0 %v191, 113
    %v813 = vpop.permute.xlu0 %812
    %814 = vrot.lane.b32.xlu0 %v193, 113
    %v815 = vpop.permute.xlu0 %814
    %vm816 = vcmp.lt.s32.totalorder %v216, 113
    %v817 = vsel %vm816, %v813, %v815
    %v818 = vsel %vm816, %v811, %v813
    %v819 = vsel %vm816, %v809, %v811
    %v820 = vsel %vm816, %v815, %v809
    %s821 = scalar_lea.vmem [#allocation2], 5
    %v822 = vld [vmem:[%s821] ss:$8 sm:$0xf]
    %v824 = vlaneseq
    %v825 = vshrl.u32 %v824, 7
    %v826 = vsub.s32 0, %v825
    %v827 = vrot.slane %v822, %v826
    %v828 = vlaneseq
    %v829 = vshrl.u32 %v828, 7
    %v830 = vsub.s32 1, %v829
    %v831 = vrot.slane %v822, %v830
    %v832 = vlaneseq
    %v833 = vshrl.u32 %v832, 7
    %v834 = vsub.s32 2, %v833
    %v835 = vrot.slane %v822, %v834
    %v836 = vlaneseq
    %v837 = vshrl.u32 %v836, 7
    %v838 = vsub.s32 3, %v837
    %v839 = vrot.slane %v822, %v838
    %v844 = vmul.f32 %v819, %v827
    %v845 = vmul.f32 %v818, %v831
    %v846 = vmul.f32 %v817, %v835
    %v847 = vmul.f32 %v820, %v839
    %848 = vrot.lane.b32.xlu0 %v144, 98
    %v849 = vpop.permute.xlu0 %848
    %850 = vrot.lane.b32.xlu0 %v146, 98
    %v851 = vpop.permute.xlu0 %850
    %852 = vrot.lane.b32.xlu0 %v195, 98
    %v853 = vpop.permute.xlu0 %852
    %854 = vrot.lane.b32.xlu0 %v197, 98
    %v855 = vpop.permute.xlu0 %854
    %vm856 = vcmp.lt.s32.totalorder %v216, 98
    %v857 = vsel %vm856, %v853, %v855
    %v858 = vsel %vm856, %v851, %v853
    %v859 = vsel %vm856, %v849, %v851
    %v860 = vsel %vm856, %v855, %v849
    %s861 = scalar_lea.vmem [#allocation2], 37
    %v862 = vld [vmem:[%s861] ss:$8 sm:$0xf]
    %v864 = vlaneseq
    %v865 = vshrl.u32 %v864, 7
    %v866 = vsub.s32 0, %v865
    %v867 = vrot.slane %v862, %v866
    %v868 = vlaneseq
    %v869 = vshrl.u32 %v868, 7
    %v870 = vsub.s32 1, %v869
    %v871 = vrot.slane %v862, %v870
    %v872 = vlaneseq
    %v873 = vshrl.u32 %v872, 7
    %v874 = vsub.s32 2, %v873
    %v875 = vrot.slane %v862, %v874
    %v876 = vlaneseq
    %v877 = vshrl.u32 %v876, 7
    %v878 = vsub.s32 3, %v877
    %v879 = vrot.slane %v862, %v878
    %v884 = vmul.f32 %v859, %v867
    %v885 = vmul.f32 %v858, %v871
    %v886 = vmul.f32 %v857, %v875
    %v887 = vmul.f32 %v860, %v879
    %888 = vrot.lane.b32.xlu0 %v150, 83
    %v889 = vpop.permute.xlu0 %888
    %890 = vrot.lane.b32.xlu0 %v152, 83
    %v891 = vpop.permute.xlu0 %890
    %892 = vrot.lane.b32.xlu0 %v201, 83
    %v893 = vpop.permute.xlu0 %892
    %894 = vrot.lane.b32.xlu0 %v203, 83
    %v895 = vpop.permute.xlu0 %894
    %vm896 = vcmp.lt.s32.totalorder %v216, 83
    %v897 = vsel %vm896, %v893, %v895
    %v898 = vsel %vm896, %v891, %v893
    %v899 = vsel %vm896, %v889, %v891
    %v900 = vsel %vm896, %v895, %v889
    %s901 = scalar_lea.vmem [#allocation2], 69
    %v902 = vld [vmem:[%s901] ss:$8 sm:$0xf]
    %v904 = vlaneseq
    %v905 = vshrl.u32 %v904, 7
    %v906 = vsub.s32 0, %v905
    %v907 = vrot.slane %v902, %v906
    %v908 = vlaneseq
    %v909 = vshrl.u32 %v908, 7
    %v910 = vsub.s32 1, %v909
    %v911 = vrot.slane %v902, %v910
    %v912 = vlaneseq
    %v913 = vshrl.u32 %v912, 7
    %v914 = vsub.s32 2, %v913
    %v915 = vrot.slane %v902, %v914
    %v916 = vlaneseq
    %v917 = vshrl.u32 %v916, 7
    %v918 = vsub.s32 3, %v917
    %v919 = vrot.slane %v902, %v918
    %v924 = vmul.f32 %v899, %v907
    %v925 = vmul.f32 %v898, %v911
    %v926 = vmul.f32 %v897, %v915
    %v927 = vmul.f32 %v900, %v919
    %928 = vrot.lane.b32.xlu0 %v140, 112
    %v929 = vpop.permute.xlu0 %928
    %930 = vrot.lane.b32.xlu0 %v142, 112
    %v931 = vpop.permute.xlu0 %930
    %932 = vrot.lane.b32.xlu0 %v191, 112
    %v933 = vpop.permute.xlu0 %932
    %934 = vrot.lane.b32.xlu0 %v193, 112
    %v935 = vpop.permute.xlu0 %934
    %vm936 = vcmp.lt.s32.totalorder %v216, 112
    %v937 = vsel %vm936, %v933, %v935
    %v938 = vsel %vm936, %v931, %v933
    %v939 = vsel %vm936, %v929, %v931
    %v940 = vsel %vm936, %v935, %v929
    %s941 = scalar_lea.vmem [#allocation2], 6
    %v942 = vld [vmem:[%s941] ss:$8 sm:$0xf]
    %v944 = vlaneseq
    %v945 = vshrl.u32 %v944, 7
    %v946 = vsub.s32 0, %v945
    %v947 = vrot.slane %v942, %v946
    %v948 = vlaneseq
    %v949 = vshrl.u32 %v948, 7
    %v950 = vsub.s32 1, %v949
    %v951 = vrot.slane %v942, %v950
    %v952 = vlaneseq
    %v953 = vshrl.u32 %v952, 7
    %v954 = vsub.s32 2, %v953
    %v955 = vrot.slane %v942, %v954
    %v956 = vlaneseq
    %v957 = vshrl.u32 %v956, 7
    %v958 = vsub.s32 3, %v957
    %v959 = vrot.slane %v942, %v958
    %v964 = vmul.f32 %v939, %v947
    %v965 = vmul.f32 %v938, %v951
    %v966 = vmul.f32 %v937, %v955
    %v967 = vmul.f32 %v940, %v959
    %968 = vrot.lane.b32.xlu0 %v144, 96
    %v969 = vpop.permute.xlu0 %968
    %970 = vrot.lane.b32.xlu0 %v146, 96
    %v971 = vpop.permute.xlu0 %970
    %972 = vrot.lane.b32.xlu0 %v195, 96
    %v973 = vpop.permute.xlu0 %972
    %974 = vrot.lane.b32.xlu0 %v197, 96
    %v975 = vpop.permute.xlu0 %974
    %vm976 = vcmp.lt.s32.totalorder %v216, 96
    %v977 = vsel %vm976, %v973, %v975
    %v978 = vsel %vm976, %v971, %v973
    %v979 = vsel %vm976, %v969, %v971
    %v980 = vsel %vm976, %v975, %v969
    %s981 = scalar_lea.vmem [#allocation2], 38
    %v982 = vld [vmem:[%s981] ss:$8 sm:$0xf]
    %v984 = vlaneseq
    %v985 = vshrl.u32 %v984, 7
    %v986 = vsub.s32 0, %v985
    %v987 = vrot.slane %v982, %v986
    %v988 = vlaneseq
    %v989 = vshrl.u32 %v988, 7
    %v990 = vsub.s32 1, %v989
    %v991 = vrot.slane %v982, %v990
    %v992 = vlaneseq
    %v993 = vshrl.u32 %v992, 7
    %v994 = vsub.s32 2, %v993
    %v995 = vrot.slane %v982, %v994
    %v996 = vlaneseq
    %v997 = vshrl.u32 %v996, 7
    %v998 = vsub.s32 3, %v997
    %v999 = vrot.slane %v982, %v998
    %v1004 = vmul.f32 %v979, %v987
    %v1005 = vmul.f32 %v978, %v991
    %v1006 = vmul.f32 %v977, %v995
    %v1007 = vmul.f32 %v980, %v999
    %1008 = vrot.lane.b32.xlu0 %v150, 80
    %v1009 = vpop.permute.xlu0 %1008
    %1010 = vrot.lane.b32.xlu0 %v152, 80
    %v1011 = vpop.permute.xlu0 %1010
    %1012 = vrot.lane.b32.xlu0 %v201, 80
    %v1013 = vpop.permute.xlu0 %1012
    %1014 = vrot.lane.b32.xlu0 %v203, 80
    %v1015 = vpop.permute.xlu0 %1014
    %vm1016 = vcmp.lt.s32.totalorder %v216, 80
    %v1017 = vsel %vm1016, %v1013, %v1015
    %v1018 = vsel %vm1016, %v1011, %v1013
    %v1019 = vsel %vm1016, %v1009, %v1011
    %v1020 = vsel %vm1016, %v1015, %v1009
    %s1021 = scalar_lea.vmem [#allocation2], 70
    %v1022 = vld [vmem:[%s1021] ss:$8 sm:$0xf]
    %v1024 = vlaneseq
    %v1025 = vshrl.u32 %v1024, 7
    %v1026 = vsub.s32 0, %v1025
    %v1027 = vrot.slane %v1022, %v1026
    %v1028 = vlaneseq
    %v1029 = vshrl.u32 %v1028, 7
    %v1030 = vsub.s32 1, %v1029
    %v1031 = vrot.slane %v1022, %v1030
    %v1032 = vlaneseq
    %v1033 = vshrl.u32 %v1032, 7
    %v1034 = vsub.s32 2, %v1033
    %v1035 = vrot.slane %v1022, %v1034
    %v1036 = vlaneseq
    %v1037 = vshrl.u32 %v1036, 7
    %v1038 = vsub.s32 3, %v1037
    %v1039 = vrot.slane %v1022, %v1038
    %v1044 = vmul.f32 %v1019, %v1027
    %v1045 = vmul.f32 %v1018, %v1031
    %v1046 = vmul.f32 %v1017, %v1035
    %v1047 = vmul.f32 %v1020, %v1039
    %1048 = vrot.lane.b32.xlu0 %v140, 111
    %v1049 = vpop.permute.xlu0 %1048
    %1050 = vrot.lane.b32.xlu0 %v142, 111
    %v1051 = vpop.permute.xlu0 %1050
    %1052 = vrot.lane.b32.xlu0 %v191, 111
    %v1053 = vpop.permute.xlu0 %1052
    %1054 = vrot.lane.b32.xlu0 %v193, 111
    %v1055 = vpop.permute.xlu0 %1054
    %vm1056 = vcmp.lt.s32.totalorder %v216, 111
    %v1057 = vsel %vm1056, %v1053, %v1055
    %v1058 = vsel %vm1056, %v1051, %v1053
    %v1059 = vsel %vm1056, %v1049, %v1051
    %v1060 = vsel %vm1056, %v1055, %v1049
    %s1061 = scalar_lea.vmem [#allocation2], 7
    %v1062 = vld [vmem:[%s1061] ss:$8 sm:$0xf]
    %v1064 = vlaneseq
    %v1065 = vshrl.u32 %v1064, 7
    %v1066 = vsub.s32 0, %v1065
    %v1067 = vrot.slane %v1062, %v1066
    %v1068 = vlaneseq
    %v1069 = vshrl.u32 %v1068, 7
    %v1070 = vsub.s32 1, %v1069
    %v1071 = vrot.slane %v1062, %v1070
    %v1072 = vlaneseq
    %v1073 = vshrl.u32 %v1072, 7
    %v1074 = vsub.s32 2, %v1073
    %v1075 = vrot.slane %v1062, %v1074
    %v1076 = vlaneseq
    %v1077 = vshrl.u32 %v1076, 7
    %v1078 = vsub.s32 3, %v1077
    %v1079 = vrot.slane %v1062, %v1078
    %v1084 = vmul.f32 %v1059, %v1067
    %v1085 = vmul.f32 %v1058, %v1071
    %v1086 = vmul.f32 %v1057, %v1075
    %v1087 = vmul.f32 %v1060, %v1079
    %1088 = vrot.lane.b32.xlu0 %v144, 94
    %v1089 = vpop.permute.xlu0 %1088
    %1090 = vrot.lane.b32.xlu0 %v146, 94
    %v1091 = vpop.permute.xlu0 %1090
    %1092 = vrot.lane.b32.xlu0 %v195, 94
    %v1093 = vpop.permute.xlu0 %1092
    %1094 = vrot.lane.b32.xlu0 %v197, 94
    %v1095 = vpop.permute.xlu0 %1094
    %vm1096 = vcmp.lt.s32.totalorder %v216, 94
    %v1097 = vsel %vm1096, %v1093, %v1095
    %v1098 = vsel %vm1096, %v1091, %v1093
    %v1099 = vsel %vm1096, %v1089, %v1091
    %v1100 = vsel %vm1096, %v1095, %v1089
    %s1101 = scalar_lea.vmem [#allocation2], 39
    %v1102 = vld [vmem:[%s1101] ss:$8 sm:$0xf]
    %v1104 = vlaneseq
    %v1105 = vshrl.u32 %v1104, 7
    %v1106 = vsub.s32 0, %v1105
    %v1107 = vrot.slane %v1102, %v1106
    %v1108 = vlaneseq
    %v1109 = vshrl.u32 %v1108, 7
    %v1110 = vsub.s32 1, %v1109
    %v1111 = vrot.slane %v1102, %v1110
    %v1112 = vlaneseq
    %v1113 = vshrl.u32 %v1112, 7
    %v1114 = vsub.s32 2, %v1113
    %v1115 = vrot.slane %v1102, %v1114
    %v1116 = vlaneseq
    %v1117 = vshrl.u32 %v1116, 7
    %v1118 = vsub.s32 3, %v1117
    %v1119 = vrot.slane %v1102, %v1118
    %v1124 = vmul.f32 %v1099, %v1107
    %v1125 = vmul.f32 %v1098, %v1111
    %v1126 = vmul.f32 %v1097, %v1115
    %v1127 = vmul.f32 %v1100, %v1119
    %1128 = vrot.lane.b32.xlu0 %v150, 77
    %v1129 = vpop.permute.xlu0 %1128
    %1130 = vrot.lane.b32.xlu0 %v152, 77
    %v1131 = vpop.permute.xlu0 %1130
    %1132 = vrot.lane.b32.xlu0 %v201, 77
    %v1133 = vpop.permute.xlu0 %1132
    %1134 = vrot.lane.b32.xlu0 %v203, 77
    %v1135 = vpop.permute.xlu0 %1134
    %vm1136 = vcmp.lt.s32.totalorder %v216, 77
    %v1137 = vsel %vm1136, %v1133, %v1135
    %v1138 = vsel %vm1136, %v1131, %v1133
    %v1139 = vsel %vm1136, %v1129, %v1131
    %v1140 = vsel %vm1136, %v1135, %v1129
    %s1141 = scalar_lea.vmem [#allocation2], 71
    %v1142 = vld [vmem:[%s1141] ss:$8 sm:$0xf]
    %v1144 = vlaneseq
    %v1145 = vshrl.u32 %v1144, 7
    %v1146 = vsub.s32 0, %v1145
    %v1147 = vrot.slane %v1142, %v1146
    %v1148 = vlaneseq
    %v1149 = vshrl.u32 %v1148, 7
    %v1150 = vsub.s32 1, %v1149
    %v1151 = vrot.slane %v1142, %v1150
    %v1152 = vlaneseq
    %v1153 = vshrl.u32 %v1152, 7
    %v1154 = vsub.s32 2, %v1153
    %v1155 = vrot.slane %v1142, %v1154
    %v1156 = vlaneseq
    %v1157 = vshrl.u32 %v1156, 7
    %v1158 = vsub.s32 3, %v1157
    %v1159 = vrot.slane %v1142, %v1158
    %v1164 = vmul.f32 %v1139, %v1147
    %v1165 = vmul.f32 %v1138, %v1151
    %v1166 = vmul.f32 %v1137, %v1155
    %v1167 = vmul.f32 %v1140, %v1159
    %v1168 = vpack.c.bf16 %v284, %v244
    %v1169 = vpack.c.bf16 %v285, %v245
    %v1170 = vpack.c.bf16 %v286, %v246
    %v1171 = vpack.c.bf16 %v287, %v247
    %v1172 = vpack.c.bf16 %v364, %v324
    %v1173 = vpack.c.bf16 %v365, %v325
    %v1174 = vpack.c.bf16 %v366, %v326
    %v1175 = vpack.c.bf16 %v367, %v327
    %v1176 = vpack.c.bf16 %v444, %v404
    %v1177 = vpack.c.bf16 %v445, %v405
    %v1178 = vpack.c.bf16 %v446, %v406
    %v1179 = vpack.c.bf16 %v447, %v407
    %v1180 = vpack.c.bf16 %v524, %v484
    %v1181 = vpack.c.bf16 %v525, %v485
    %v1182 = vpack.c.bf16 %v526, %v486
    %v1183 = vpack.c.bf16 %v527, %v487
    %v1184 = vpack.c.bf16 %v604, %v564
    %v1185 = vpack.c.bf16 %v605, %v565
    %v1186 = vpack.c.bf16 %v606, %v566
    %v1187 = vpack.c.bf16 %v607, %v567
    %v1188 = vpack.c.bf16 %v684, %v644
    %v1189 = vpack.c.bf16 %v685, %v645
    %v1190 = vpack.c.bf16 %v686, %v646
    %v1191 = vpack.c.bf16 %v687, %v647
    %v1192 = vpack.c.bf16 %v144, %v140
    %v1193 = vpack.c.bf16 %v146, %v142
    %v1194 = vpack.c.bf16 %v195, %v191
    %v1195 = vpack.c.bf16 %v197, %v193
    %v1196 = vpack.c.bf16 %v724, %v150
    %v1197 = vpack.c.bf16 %v725, %v152
    %v1198 = vpack.c.bf16 %v726, %v201
    %v1199 = vpack.c.bf16 %v727, %v203
    %v1200 = vpack.c.bf16 %v804, %v764
    %v1201 = vpack.c.bf16 %v805, %v765
    %v1202 = vpack.c.bf16 %v806, %v766
    %v1203 = vpack.c.bf16 %v807, %v767
    %v1204 = vpack.c.bf16 %v884, %v844
    %v1205 = vpack.c.bf16 %v885, %v845
    %v1206 = vpack.c.bf16 %v886, %v846
    %v1207 = vpack.c.bf16 %v887, %v847
    %v1208 = vpack.c.bf16 %v964, %v924
    %v1209 = vpack.c.bf16 %v965, %v925
    %v1210 = vpack.c.bf16 %v966, %v926
    %v1211 = vpack.c.bf16 %v967, %v927
    %v1212 = vpack.c.bf16 %v1044, %v1004
    %v1213 = vpack.c.bf16 %v1045, %v1005
    %v1214 = vpack.c.bf16 %v1046, %v1006
    %v1215 = vpack.c.bf16 %v1047, %v1007
    %v1216 = vpack.c.bf16 %v1124, %v1084
    %v1217 = vpack.c.bf16 %v1125, %v1085
    %v1218 = vpack.c.bf16 %v1126, %v1086
    %v1219 = vpack.c.bf16 %v1127, %v1087
    %v1220 = vpack.c.bf16 %v1164, %v1164
    %v1221 = vpack.c.bf16 %v1165, %v1165
    %v1222 = vpack.c.bf16 %v1166, %v1166
    %v1223 = vpack.c.bf16 %v1167, %v1167
    %v1224 = vld [vmem:[%s4] sm:$0xff]
    %v1225 = vld [vmem:[%s4 + $0x8] sm:$0xff]
    %v1226 = vld [vmem:[%s5] sm:$0xff]
    %v1227 = vld [vmem:[%s5 + $0x8] sm:$0xff]
    %1229 = vset.pattern.permute.xlu0 0
    %1230 = vperm.xlu0 %1229, %v1226
    %v1231 = vpop.permute.xlu0 %1230
    %1234 = vset.pattern.permute.xlu0 0
    %1235 = vperm.xlu0 %1234, %v1227
    %v1236 = vpop.permute.xlu0 %1235
    %v1240 = vunpack.c.l.b16 %v1224
    %v1241 = vunpack.c.h.b16 %v1224
    %v1242 = vunpack.c.l.b16 %v1225
    %v1243 = vunpack.c.h.b16 %v1225
    %v1244 = vpack.c.b16 %v1242, %v1240
    %v1245 = vpack.c.b16 %v1243, %v1241
    %vm1247 = vcmask 719872
    %v1249 = vsel %vm1247, %v1245, 0
    %vm1251 = vcmask 1043456
    %v1253 = vsel %vm1251, %v1220, 0
    %v1256 = vsel %vm1251, %v1221, 0
    %v1259 = vsel %vm1251, %v1222, 0
    %v1262 = vsel %vm1251, %v1223, 0
    %1264 = vmatprep.subr.bf16.mxu0 %v1169
    %1265 = vmatpush1.bf16.msra.mxu0 %v1168
    %1266 = vmatprep.subr.bf16.mxu0 %v1173
    %1267 = vmatpush1.bf16.msra.mxu0 %v1172
    %1268 = vmatprep.subr.bf16.mxu0 %v1177
    %1269 = vmatpush1.bf16.msra.mxu0 %v1176
    %1270 = vmatprep.subr.bf16.mxu0 %v1181
    %1271 = vmatpush1.bf16.msra.mxu0 %v1180
    %1272 = vmatprep.subr.bf16.mxu0 %v1185
    %1273 = vmatpush1.bf16.msra.mxu0 %v1184
    %1274 = vmatprep.subr.bf16.mxu0 %v1189
    %1275 = vmatpush1.bf16.msra.mxu0 %v1188
    %1276 = vmatprep.subr.bf16.mxu0 %v1193
    %1277 = vmatpush1.bf16.msra.mxu0 %v1192
    %1278 = vmatprep.subr.bf16.mxu0 %v1197
    %1279 = vmatpush1.bf16.msra.mxu0 %v1196
    %1280 = vmatprep.subr.bf16.mxu0 %v1201
    %1281 = vmatpush1.bf16.msra.mxu0 %v1200
    %1282 = vmatprep.subr.bf16.mxu0 %v1205
    %1283 = vmatpush1.bf16.msra.mxu0 %v1204
    %1284 = vmatprep.subr.bf16.mxu0 %v1209
    %1285 = vmatpush1.bf16.msra.mxu0 %v1208
    %1286 = vmatprep.subr.bf16.mxu0 %v1213
    %1287 = vmatpush1.bf16.msra.mxu0 %v1212
    %1288 = vmatprep.subr.bf16.mxu0 %v1217
    %1289 = vmatpush1.bf16.msra.mxu0 %v1216
    %1290 = vmatprep.subr.bf16.mxu0 %v1256
    %1291 = vmatpush1.bf16.msra.mxu0 %v1253
    %1292 = vmatprep.subr.bf16.mxu0 0
    %1293 = vmatpush1.bf16.msra.mxu0 0
    %1294 = vmatprep.subr.bf16.mxu0 0
    %1295 = vmatpush1.bf16.msra.mxu0 0
    %1296 = vmatprep.mubr.bf16.mxu0 %v1249
    %1297 = vmatmul.mubr.bf16.gmra.mrb[0].mxu0 %v1244
    %v1298 = vpop.f32.mrb[0].mxu0
    %v1299 = vadd.f32 %v1231, %v1298
    %v1300 = vpop.f32.mrb[0].mxu0
    %v1301 = vadd.f32 %v1231, %v1300
    %v1302 = vpop.f32.mrb[0].mxu0
    %v1303 = vadd.f32 %v1236, %v1302
    %v1304 = vpop.f32.mrb[0].mxu0
    %v1305 = vadd.f32 %v1236, %v1304
    %1306 = vdwg.mxu0
    %1307 = vmatprep.subr.bf16.mxu0 %v1171
    %1308 = vmatpush1.bf16.msra.mxu0 %v1170
    %1309 = vmatprep.subr.bf16.mxu0 %v1175
    %1310 = vmatpush1.bf16.msra.mxu0 %v1174
    %1311 = vmatprep.subr.bf16.mxu0 %v1179
    %1312 = vmatpush1.bf16.msra.mxu0 %v1178
    %1313 = vmatprep.subr.bf16.mxu0 %v1183
    %1314 = vmatpush1.bf16.msra.mxu0 %v1182
    %1315 = vmatprep.subr.bf16.mxu0 %v1187
    %1316 = vmatpush1.bf16.msra.mxu0 %v1186
    %1317 = vmatprep.subr.bf16.mxu0 %v1191
    %1318 = vmatpush1.bf16.msra.mxu0 %v1190
    %1319 = vmatprep.subr.bf16.mxu0 %v1195
    %1320 = vmatpush1.bf16.msra.mxu0 %v1194
    %1321 = vmatprep.subr.bf16.mxu0 %v1199
    %1322 = vmatpush1.bf16.msra.mxu0 %v1198
    %1323 = vmatprep.subr.bf16.mxu0 %v1203
    %1324 = vmatpush1.bf16.msra.mxu0 %v1202
    %1325 = vmatprep.subr.bf16.mxu0 %v1207
    %1326 = vmatpush1.bf16.msra.mxu0 %v1206
    %1327 = vmatprep.subr.bf16.mxu0 %v1211
    %1328 = vmatpush1.bf16.msra.mxu0 %v1210
    %1329 = vmatprep.subr.bf16.mxu0 %v1215
    %1330 = vmatpush1.bf16.msra.mxu0 %v1214
    %1331 = vmatprep.subr.bf16.mxu0 %v1219
    %1332 = vmatpush1.bf16.msra.mxu0 %v1218
    %1333 = vmatprep.subr.bf16.mxu0 %v1262
    %1334 = vmatpush1.bf16.msra.mxu0 %v1259
    %1335 = vmatprep.subr.bf16.mxu0 0
    %1336 = vmatpush1.bf16.msra.mxu0 0
    %1337 = vmatprep.subr.bf16.mxu0 0
    %1338 = vmatpush1.bf16.msra.mxu0 0
    %1339 = vmatprep.mubr.bf16.mxu0 %v1249
    %1340 = vmatmul.mubr.bf16.gmra.mrb[0].mxu0 %v1244
    %v1341 = vpop.f32.mrb[0].mxu0
    %v1342 = vadd.f32 %v1231, %v1341
    %v1343 = vpop.f32.mrb[0].mxu0
    %v1344 = vadd.f32 %v1231, %v1343
    %v1345 = vpop.f32.mrb[0].mxu0
    %v1346 = vadd.f32 %v1236, %v1345
    %v1347 = vpop.f32.mrb[0].mxu0
    %v1348 = vadd.f32 %v1236, %v1347
    %1349 = vdwg.mxu0
    %v1350 = vmax.f32 %v1299, 0.0
    %v1351 = vmax.f32 %v1301, 0.0
    %v1352 = vmax.f32 %v1342, 0.0
    %v1353 = vmax.f32 %v1344, 0.0
    %v1354 = vmax.f32 %v1303, 0.0
    %v1355 = vmax.f32 %v1305, 0.0
    %v1356 = vmax.f32 %v1346, 0.0
    %v1357 = vmax.f32 %v1348, 0.0
    %v1358 = vmin.f32 %v1350, 6.0
    %v1359 = vmin.f32 %v1351, 6.0
    %v1360 = vmin.f32 %v1352, 6.0
    %v1361 = vmin.f32 %v1353, 6.0
    %v1362 = vmin.f32 %v1354, 6.0
    %v1363 = vmin.f32 %v1355, 6.0
    %v1364 = vmin.f32 %v1356, 6.0
    %v1365 = vmin.f32 %v1357, 6.0
    %1366 = vrot.lane.b32.xlu0 %v1358, 17
    %v1367 = vpop.permute.xlu0 %1366
    %1368 = vrot.lane.b32.xlu0 %v1362, 17
    %v1369 = vpop.permute.xlu0 %1368
    %1370 = vrot.lane.b32.xlu0 %v1359, 17
    %v1371 = vpop.permute.xlu0 %1370
    %1372 = vrot.lane.b32.xlu0 %v1363, 17
    %v1373 = vpop.permute.xlu0 %1372
    %1374 = vrot.lane.b32.xlu0 %v1360, 17
    %v1375 = vpop.permute.xlu0 %1374
    %1376 = vrot.lane.b32.xlu0 %v1364, 17
    %v1377 = vpop.permute.xlu0 %1376
    %1378 = vrot.lane.b32.xlu0 %v1361, 17
    %v1379 = vpop.permute.xlu0 %1378
    %1380 = vrot.lane.b32.xlu0 %v1365, 17
    %v1381 = vpop.permute.xlu0 %1380
    %v1382 = vsel %vm217, %v1375, %v1379
    %v1383 = vsel %vm217, %v1377, %v1381
    %v1384 = vsel %vm217, %v1371, %v1375
    %v1385 = vsel %vm217, %v1373, %v1377
    %v1386 = vsel %vm217, %v1367, %v1371
    %v1387 = vsel %vm217, %v1369, %v1373
    %v1388 = vsel %vm217, %v1379, %v1367
    %v1389 = vsel %vm217, %v1381, %v1369
    %v1390 = vmul.f32 %v1388, %v227
    %v1391 = vmul.f32 %v1386, %v231
    %v1392 = vmul.f32 %v1384, %v235
    %v1393 = vmul.f32 %v1382, %v239
    %v1394 = vmul.f32 %v1389, %v227
    %v1395 = vmul.f32 %v1387, %v231
    %v1396 = vmul.f32 %v1385, %v235
    %v1397 = vmul.f32 %v1383, %v239
    %1398 = vrot.lane.b32.xlu0 %v1358, 16
    %v1399 = vpop.permute.xlu0 %1398
    %1400 = vrot.lane.b32.xlu0 %v1362, 16
    %v1401 = vpop.permute.xlu0 %1400
    %1402 = vrot.lane.b32.xlu0 %v1359, 16
    %v1403 = vpop.permute.xlu0 %1402
    %1404 = vrot.lane.b32.xlu0 %v1363, 16
    %v1405 = vpop.permute.xlu0 %1404
    %1406 = vrot.lane.b32.xlu0 %v1360, 16
    %v1407 = vpop.permute.xlu0 %1406
    %1408 = vrot.lane.b32.xlu0 %v1364, 16
    %v1409 = vpop.permute.xlu0 %1408
    %1410 = vrot.lane.b32.xlu0 %v1361, 16
    %v1411 = vpop.permute.xlu0 %1410
    %1412 = vrot.lane.b32.xlu0 %v1365, 16
    %v1413 = vpop.permute.xlu0 %1412
    %v1414 = vsel %vm336, %v1407, %v1411
    %v1415 = vsel %vm336, %v1409, %v1413
    %v1416 = vsel %vm336, %v1403, %v1407
    %v1417 = vsel %vm336, %v1405, %v1409
    %v1418 = vsel %vm336, %v1399, %v1403
    %v1419 = vsel %vm336, %v1401, %v1405
    %v1420 = vsel %vm336, %v1411, %v1399
    %v1421 = vsel %vm336, %v1413, %v1401
    %v1422 = vmul.f32 %v1420, %v347
    %v1423 = vmul.f32 %v1418, %v351
    %v1424 = vmul.f32 %v1416, %v355
    %v1425 = vmul.f32 %v1414, %v359
    %v1426 = vmul.f32 %v1421, %v347
    %v1427 = vmul.f32 %v1419, %v351
    %v1428 = vmul.f32 %v1417, %v355
    %v1429 = vmul.f32 %v1415, %v359
    %1430 = vrot.lane.b32.xlu0 %v1358, 15
    %v1431 = vpop.permute.xlu0 %1430
    %1432 = vrot.lane.b32.xlu0 %v1362, 15
    %v1433 = vpop.permute.xlu0 %1432
    %1434 = vrot.lane.b32.xlu0 %v1359, 15
    %v1435 = vpop.permute.xlu0 %1434
    %1436 = vrot.lane.b32.xlu0 %v1363, 15
    %v1437 = vpop.permute.xlu0 %1436
    %1438 = vrot.lane.b32.xlu0 %v1360, 15
    %v1439 = vpop.permute.xlu0 %1438
    %1440 = vrot.lane.b32.xlu0 %v1364, 15
    %v1441 = vpop.permute.xlu0 %1440
    %1442 = vrot.lane.b32.xlu0 %v1361, 15
    %v1443 = vpop.permute.xlu0 %1442
    %1444 = vrot.lane.b32.xlu0 %v1365, 15
    %v1445 = vpop.permute.xlu0 %1444
    %v1446 = vsel %vm456, %v1439, %v1443
    %v1447 = vsel %vm456, %v1441, %v1445
    %v1448 = vsel %vm456, %v1435, %v1439
    %v1449 = vsel %vm456, %v1437, %v1441
    %v1450 = vsel %vm456, %v1431, %v1435
    %v1451 = vsel %vm456, %v1433, %v1437
    %v1452 = vsel %vm456, %v1443, %v1431
    %v1453 = vsel %vm456, %v1445, %v1433
    %v1454 = vmul.f32 %v1452, %v467
    %v1455 = vmul.f32 %v1450, %v471
    %v1456 = vmul.f32 %v1448, %v475
    %v1457 = vmul.f32 %v1446, %v479
    %v1458 = vmul.f32 %v1453, %v467
    %v1459 = vmul.f32 %v1451, %v471
    %v1460 = vmul.f32 %v1449, %v475
    %v1461 = vmul.f32 %v1447, %v479
    %1462 = vrot.lane.b32.xlu0 %v1358, 1
    %v1463 = vpop.permute.xlu0 %1462
    %1464 = vrot.lane.b32.xlu0 %v1362, 1
    %v1465 = vpop.permute.xlu0 %1464
    %1466 = vrot.lane.b32.xlu0 %v1359, 1
    %v1467 = vpop.permute.xlu0 %1466
    %1468 = vrot.lane.b32.xlu0 %v1363, 1
    %v1469 = vpop.permute.xlu0 %1468
    %1470 = vrot.lane.b32.xlu0 %v1360, 1
    %v1471 = vpop.permute.xlu0 %1470
    %1472 = vrot.lane.b32.xlu0 %v1364, 1
    %v1473 = vpop.permute.xlu0 %1472
    %1474 = vrot.lane.b32.xlu0 %v1361, 1
    %v1475 = vpop.permute.xlu0 %1474
    %1476 = vrot.lane.b32.xlu0 %v1365, 1
    %v1477 = vpop.permute.xlu0 %1476
    %v1478 = vsel %vm576, %v1471, %v1475
    %v1479 = vsel %vm576, %v1473, %v1477
    %v1480 = vsel %vm576, %v1467, %v1471
    %v1481 = vsel %vm576, %v1469, %v1473
    %v1482 = vsel %vm576, %v1463, %v1467
    %v1483 = vsel %vm576, %v1465, %v1469
    %v1484 = vsel %vm576, %v1475, %v1463
    %v1485 = vsel %vm576, %v1477, %v1465
    %v1486 = vmul.f32 %v1484, %v587
    %v1487 = vmul.f32 %v1482, %v591
    %v1488 = vmul.f32 %v1480, %v595
    %v1489 = vmul.f32 %v1478, %v599
    %v1490 = vmul.f32 %v1485, %v587
    %v1491 = vmul.f32 %v1483, %v591
    %v1492 = vmul.f32 %v1481, %v595
    %v1493 = vmul.f32 %v1479, %v599
    %1494 = vrot.lane.b32.xlu0 %v1358, 127
    %v1495 = vpop.permute.xlu0 %1494
    %1496 = vrot.lane.b32.xlu0 %v1362, 127
    %v1497 = vpop.permute.xlu0 %1496
    %1498 = vrot.lane.b32.xlu0 %v1359, 127
    %v1499 = vpop.permute.xlu0 %1498
    %1500 = vrot.lane.b32.xlu0 %v1363, 127
    %v1501 = vpop.permute.xlu0 %1500
    %1502 = vrot.lane.b32.xlu0 %v1360, 127
    %v1503 = vpop.permute.xlu0 %1502
    %1504 = vrot.lane.b32.xlu0 %v1364, 127
    %v1505 = vpop.permute.xlu0 %1504
    %1506 = vrot.lane.b32.xlu0 %v1361, 127
    %v1507 = vpop.permute.xlu0 %1506
    %1508 = vrot.lane.b32.xlu0 %v1365, 127
    %v1509 = vpop.permute.xlu0 %1508
    %v1510 = vsel %vm696, %v1503, %v1507
    %v1511 = vsel %vm696, %v1505, %v1509
    %v1512 = vsel %vm696, %v1499, %v1503
    %v1513 = vsel %vm696, %v1501, %v1505
    %v1514 = vsel %vm696, %v1495, %v1499
    %v1515 = vsel %vm696, %v1497, %v1501
    %v1516 = vsel %vm696, %v1507, %v1495
    %v1517 = vsel %vm696, %v1509, %v1497
    %v1518 = vmul.f32 %v1514, %v707
    %v1519 = vmul.f32 %v1512, %v711
    %v1520 = vmul.f32 %v1510, %v715
    %v1521 = vmul.f32 %v1516, %v719
    %v1522 = vmul.f32 %v1515, %v707
    %v1523 = vmul.f32 %v1513, %v711
    %v1524 = vmul.f32 %v1511, %v715
    %v1525 = vmul.f32 %v1517, %v719
    %1526 = vrot.lane.b32.xlu0 %v1358, 113
    %v1527 = vpop.permute.xlu0 %1526
    %1528 = vrot.lane.b32.xlu0 %v1362, 113
    %v1529 = vpop.permute.xlu0 %1528
    %1530 = vrot.lane.b32.xlu0 %v1359, 113
    %v1531 = vpop.permute.xlu0 %1530
    %1532 = vrot.lane.b32.xlu0 %v1363, 113
    %v1533 = vpop.permute.xlu0 %1532
    %1534 = vrot.lane.b32.xlu0 %v1360, 113
    %v1535 = vpop.permute.xlu0 %1534
    %1536 = vrot.lane.b32.xlu0 %v1364, 113
    %v1537 = vpop.permute.xlu0 %1536
    %1538 = vrot.lane.b32.xlu0 %v1361, 113
    %v1539 = vpop.permute.xlu0 %1538
    %1540 = vrot.lane.b32.xlu0 %v1365, 113
    %v1541 = vpop.permute.xlu0 %1540
    %v1542 = vsel %vm816, %v1535, %v1539
    %v1543 = vsel %vm816, %v1537, %v1541
    %v1544 = vsel %vm816, %v1531, %v1535
    %v1545 = vsel %vm816, %v1533, %v1537
    %v1546 = vsel %vm816, %v1527, %v1531
    %v1547 = vsel %vm816, %v1529, %v1533
    %v1548 = vsel %vm816, %v1539, %v1527
    %v1549 = vsel %vm816, %v1541, %v1529
    %v1550 = vmul.f32 %v1546, %v827
    %v1551 = vmul.f32 %v1544, %v831
    %v1552 = vmul.f32 %v1542, %v835
    %v1553 = vmul.f32 %v1548, %v839
    %v1554 = vmul.f32 %v1547, %v827
    %v1555 = vmul.f32 %v1545, %v831
    %v1556 = vmul.f32 %v1543, %v835
    %v1557 = vmul.f32 %v1549, %v839
    %1558 = vrot.lane.b32.xlu0 %v1358, 112
    %v1559 = vpop.permute.xlu0 %1558
    %1560 = vrot.lane.b32.xlu0 %v1362, 112
    %v1561 = vpop.permute.xlu0 %1560
    %1562 = vrot.lane.b32.xlu0 %v1359, 112
    %v1563 = vpop.permute.xlu0 %1562
    %1564 = vrot.lane.b32.xlu0 %v1363, 112
    %v1565 = vpop.permute.xlu0 %1564
    %1566 = vrot.lane.b32.xlu0 %v1360, 112
    %v1567 = vpop.permute.xlu0 %1566
    %1568 = vrot.lane.b32.xlu0 %v1364, 112
    %v1569 = vpop.permute.xlu0 %1568
    %1570 = vrot.lane.b32.xlu0 %v1361, 112
    %v1571 = vpop.permute.xlu0 %1570
    %1572 = vrot.lane.b32.xlu0 %v1365, 112
    %v1573 = vpop.permute.xlu0 %1572
    %v1574 = vsel %vm936, %v1567, %v1571
    %v1575 = vsel %vm936, %v1569, %v1573
    %v1576 = vsel %vm936, %v1563, %v1567
    %v1577 = vsel %vm936, %v1565, %v1569
    %v1578 = vsel %vm936, %v1559, %v1563
    %v1579 = vsel %vm936, %v1561, %v1565
    %v1580 = vsel %vm936, %v1571, %v1559
    %v1581 = vsel %vm936, %v1573, %v1561
    %v1582 = vmul.f32 %v1578, %v947
    %v1583 = vmul.f32 %v1576, %v951
    %v1584 = vmul.f32 %v1574, %v955
    %v1585 = vmul.f32 %v1580, %v959
    %v1586 = vmul.f32 %v1579, %v947
    %v1587 = vmul.f32 %v1577, %v951
    %v1588 = vmul.f32 %v1575, %v955
    %v1589 = vmul.f32 %v1581, %v959
    %1590 = vrot.lane.b32.xlu0 %v1358, 111
    %v1591 = vpop.permute.xlu0 %1590
    %1592 = vrot.lane.b32.xlu0 %v1362, 111
    %v1593 = vpop.permute.xlu0 %1592
    %1594 = vrot.lane.b32.xlu0 %v1359, 111
    %v1595 = vpop.permute.xlu0 %1594
    %1596 = vrot.lane.b32.xlu0 %v1363, 111
    %v1597 = vpop.permute.xlu0 %1596
    %1598 = vrot.lane.b32.xlu0 %v1360, 111
    %v1599 = vpop.permute.xlu0 %1598
    %1600 = vrot.lane.b32.xlu0 %v1364, 111
    %v1601 = vpop.permute.xlu0 %1600
    %1602 = vrot.lane.b32.xlu0 %v1361, 111
    %v1603 = vpop.permute.xlu0 %1602
    %1604 = vrot.lane.b32.xlu0 %v1365, 111
    %v1605 = vpop.permute.xlu0 %1604
    %v1606 = vsel %vm1056, %v1599, %v1603
    %v1607 = vsel %vm1056, %v1601, %v1605
    %v1608 = vsel %vm1056, %v1595, %v1599
    %v1609 = vsel %vm1056, %v1597, %v1601
    %v1610 = vsel %vm1056, %v1591, %v1595
    %v1611 = vsel %vm1056, %v1593, %v1597
    %v1612 = vsel %vm1056, %v1603, %v1591
    %v1613 = vsel %vm1056, %v1605, %v1593
    %v1614 = vmul.f32 %v1610, %v1067
    %v1615 = vmul.f32 %v1608, %v1071
    %v1616 = vmul.f32 %v1606, %v1075
    %v1617 = vmul.f32 %v1612, %v1079
    %v1618 = vmul.f32 %v1611, %v1067
    %v1619 = vmul.f32 %v1609, %v1071
    %v1620 = vmul.f32 %v1607, %v1075
    %v1621 = vmul.f32 %v1613, %v1079
    %v1622 = vpack.c.bf16 %v1394, %v1390
    %v1623 = vpack.c.bf16 %v1395, %v1391
    %v1624 = vpack.c.bf16 %v1396, %v1392
    %v1625 = vpack.c.bf16 %v1397, %v1393
    %v1626 = vpack.c.bf16 %v1426, %v1422
    %v1627 = vpack.c.bf16 %v1427, %v1423
    %v1628 = vpack.c.bf16 %v1428, %v1424
    %v1629 = vpack.c.bf16 %v1429, %v1425
    %v1630 = vpack.c.bf16 %v1458, %v1454
    %v1631 = vpack.c.bf16 %v1459, %v1455
    %v1632 = vpack.c.bf16 %v1460, %v1456
    %v1633 = vpack.c.bf16 %v1461, %v1457
    %v1634 = vpack.c.bf16 %v1490, %v1486
    %v1635 = vpack.c.bf16 %v1491, %v1487
    %v1636 = vpack.c.bf16 %v1492, %v1488
    %v1637 = vpack.c.bf16 %v1493, %v1489
    %v1638 = vpack.c.bf16 %v1362, %v1358
    %v1639 = vpack.c.bf16 %v1363, %v1359
    %v1640 = vpack.c.bf16 %v1364, %v1360
    %v1641 = vpack.c.bf16 %v1365, %v1361
    %v1642 = vpack.c.bf16 %v1522, %v1518
    %v1643 = vpack.c.bf16 %v1523, %v1519
    %v1644 = vpack.c.bf16 %v1524, %v1520
    %v1645 = vpack.c.bf16 %v1525, %v1521
    %v1646 = vpack.c.bf16 %v1554, %v1550
    %v1647 = vpack.c.bf16 %v1555, %v1551
    %v1648 = vpack.c.bf16 %v1556, %v1552
    %v1649 = vpack.c.bf16 %v1557, %v1553
    %v1650 = vpack.c.bf16 %v1586, %v1582
    %v1651 = vpack.c.bf16 %v1587, %v1583
    %v1652 = vpack.c.bf16 %v1588, %v1584
    %v1653 = vpack.c.bf16 %v1589, %v1585
    %v1654 = vpack.c.bf16 %v1618, %v1614
    %v1655 = vpack.c.bf16 %v1619, %v1615
    %v1656 = vpack.c.bf16 %v1620, %v1616
    %v1657 = vpack.c.bf16 %v1621, %v1617
    %v1658 = vld [vmem:[%s6] sm:$0xff]
    %v1659 = vld [vmem:[%s6 + $0x8] sm:$0xff]
    %v1660 = vld [vmem:[%s7] sm:$0xff]
    %v1661 = vld [vmem:[%s7 + $0x8] sm:$0xff]
    %1663 = vset.pattern.permute.xlu0 0
    %1664 = vperm.xlu0 %1663, %v1660
    %v1665 = vpop.permute.xlu0 %1664
    %1668 = vset.pattern.permute.xlu0 0
    %1669 = vperm.xlu0 %1668, %v1661
    %v1670 = vpop.permute.xlu0 %1669
    %v1674 = vunpack.c.l.b16 %v1658
    %v1675 = vunpack.c.h.b16 %v1658
    %v1676 = vunpack.c.l.b16 %v1659
    %v1677 = vunpack.c.h.b16 %v1659
    %v1678 = vpack.c.b16 %v1676, %v1674
    %v1679 = vpack.c.b16 %v1677, %v1675
    %v1682 = vsel %vm98, %v1679, 0
    %1684 = vmatprep.subr.bf16.mxu0 %v1623
    %1685 = vmatpush1.bf16.msra.mxu0 %v1622
    %1686 = vmatprep.subr.bf16.mxu0 %v1627
    %1687 = vmatpush1.bf16.msra.mxu0 %v1626
    %1688 = vmatprep.subr.bf16.mxu0 %v1631
    %1689 = vmatpush1.bf16.msra.mxu0 %v1630
    %1690 = vmatprep.subr.bf16.mxu0 %v1635
    %1691 = vmatpush1.bf16.msra.mxu0 %v1634
    %1692 = vmatprep.subr.bf16.mxu0 %v1639
    %1693 = vmatpush1.bf16.msra.mxu0 %v1638
    %1694 = vmatprep.subr.bf16.mxu0 %v1643
    %1695 = vmatpush1.bf16.msra.mxu0 %v1642
    %1696 = vmatprep.subr.bf16.mxu0 %v1647
    %1697 = vmatpush1.bf16.msra.mxu0 %v1646
    %1698 = vmatprep.subr.bf16.mxu0 %v1651
    %1699 = vmatpush1.bf16.msra.mxu0 %v1650
    %1700 = vmatprep.subr.bf16.mxu0 %v1655
    %1701 = vmatpush1.bf16.msra.mxu0 %v1654
    %1702 = vmatprep.subr.bf16.mxu0 0
    %1703 = vmatpush1.bf16.msra.mxu0 0
    %1704 = vmatprep.subr.bf16.mxu0 0
    %1705 = vmatpush1.bf16.msra.mxu0 0
    %1706 = vmatprep.subr.bf16.mxu0 0
    %1707 = vmatpush1.bf16.msra.mxu0 0
    %1708 = vmatprep.subr.bf16.mxu0 0
    %1709 = vmatpush1.bf16.msra.mxu0 0
    %1710 = vmatprep.subr.bf16.mxu0 0
    %1711 = vmatpush1.bf16.msra.mxu0 0
    %1712 = vmatprep.subr.bf16.mxu0 0
    %1713 = vmatpush1.bf16.msra.mxu0 0
    %1714 = vmatprep.subr.bf16.mxu0 0
    %1715 = vmatpush1.bf16.msra.mxu0 0
    %1716 = vmatprep.mubr.bf16.mxu0 %v1682
    %1717 = vmatmul.mubr.bf16.gmra.mrb[0].mxu0 %v1678
    %v1718 = vpop.f32.mrb[0].mxu0
    %v1719 = vadd.f32 %v1665, %v1718
    %v1720 = vpop.f32.mrb[0].mxu0
    %v1721 = vadd.f32 %v1665, %v1720
    %v1722 = vpop.f32.mrb[0].mxu0
    %v1723 = vadd.f32 %v1670, %v1722
    %v1724 = vpop.f32.mrb[0].mxu0
    %v1725 = vadd.f32 %v1670, %v1724
    %1726 = vdwg.mxu0
    %1727 = vmatprep.subr.bf16.mxu0 %v1625
    %1728 = vmatpush1.bf16.msra.mxu0 %v1624
    %1729 = vmatprep.subr.bf16.mxu0 %v1629
    %1730 = vmatpush1.bf16.msra.mxu0 %v1628
    %1731 = vmatprep.subr.bf16.mxu0 %v1633
    %1732 = vmatpush1.bf16.msra.mxu0 %v1632
    %1733 = vmatprep.subr.bf16.mxu0 %v1637
    %1734 = vmatpush1.bf16.msra.mxu0 %v1636
    %1735 = vmatprep.subr.bf16.mxu0 %v1641
    %1736 = vmatpush1.bf16.msra.mxu0 %v1640
    %1737 = vmatprep.subr.bf16.mxu0 %v1645
    %1738 = vmatpush1.bf16.msra.mxu0 %v1644
    %1739 = vmatprep.subr.bf16.mxu0 %v1649
    %1740 = vmatpush1.bf16.msra.mxu0 %v1648
    %1741 = vmatprep.subr.bf16.mxu0 %v1653
    %1742 = vmatpush1.bf16.msra.mxu0 %v1652
    %1743 = vmatprep.subr.bf16.mxu0 %v1657
    %1744 = vmatpush1.bf16.msra.mxu0 %v1656
    %1745 = vmatprep.subr.bf16.mxu0 0
    %1746 = vmatpush1.bf16.msra.mxu0 0
    %1747 = vmatprep.subr.bf16.mxu0 0
    %1748 = vmatpush1.bf16.msra.mxu0 0
    %1749 = vmatprep.subr.bf16.mxu0 0
    %1750 = vmatpush1.bf16.msra.mxu0 0
    %1751 = vmatprep.subr.bf16.mxu0 0
    %1752 = vmatpush1.bf16.msra.mxu0 0
    %1753 = vmatprep.subr.bf16.mxu0 0
    %1754 = vmatpush1.bf16.msra.mxu0 0
    %1755 = vmatprep.subr.bf16.mxu0 0
    %1756 = vmatpush1.bf16.msra.mxu0 0
    %1757 = vmatprep.subr.bf16.mxu0 0
    %1758 = vmatpush1.bf16.msra.mxu0 0
    %1759 = vmatprep.mubr.bf16.mxu0 %v1682
    %1760 = vmatmul.mubr.bf16.gmra.mrb[0].mxu0 %v1678
    %v1761 = vpop.f32.mrb[0].mxu0
    %v1762 = vadd.f32 %v1665, %v1761
    %v1763 = vpop.f32.mrb[0].mxu0
    %v1764 = vadd.f32 %v1665, %v1763
    %v1765 = vpop.f32.mrb[0].mxu0
    %v1766 = vadd.f32 %v1670, %v1765
    %v1767 = vpop.f32.mrb[0].mxu0
    %v1768 = vadd.f32 %v1670, %v1767
    %1769 = vdwg.mxu0
    %v1770 = vmax.f32 %v1719, 0.0
    %v1771 = vmax.f32 %v1721, 0.0
    %v1772 = vmax.f32 %v1762, 0.0
    %v1773 = vmax.f32 %v1764, 0.0
    %v1774 = vmax.f32 %v1723, 0.0
    %v1775 = vmax.f32 %v1725, 0.0
    %v1776 = vmax.f32 %v1766, 0.0
    %v1777 = vmax.f32 %v1768, 0.0
    %v1778 = vmin.f32 %v1770, 6.0
    %v1779 = vmin.f32 %v1771, 6.0
    %v1780 = vmin.f32 %v1772, 6.0
    %v1781 = vmin.f32 %v1773, 6.0
    %v1782 = vmin.f32 %v1774, 6.0
    %v1783 = vmin.f32 %v1775, 6.0
    %v1784 = vmin.f32 %v1776, 6.0
    %v1785 = vmin.f32 %v1777, 6.0
    %1786 = vst [vmem:[#allocation5] sm:$0xff] %v1778
    %1787 = vst [vmem:[#allocation5 + $0x8] sm:$0xff] %v1779
    %1788 = vst [vmem:[#allocation5 + $0x10] sm:$0xff] %v1780
    %1789 = vst [vmem:[#allocation5 + $0x18] sm:$0xff] %v1781
    %1790 = vst [vmem:[#allocation5 + $0x20] sm:$0xff] %v1782
    %1791 = vst [vmem:[#allocation5 + $0x28] sm:$0xff] %v1783
    %1792 = vst [vmem:[#allocation5 + $0x30] sm:$0xff] %v1784
    %1793 = vst [vmem:[#allocation5 + $0x38] sm:$0xff] %v1785
    // Predicated region
    $region38: #{tpu_custom_call.1} parent=1 // pred_check
      _
    $region39: #{tpu_custom_call.1} parent=1 // pred_check_branch
      %1795 = sbr.rel (0) target = $region41
    $region40: #{tpu_custom_call.1} parent=1 // pred_region
      %s1797 = ssub.s32 1024, 1024
      %1798 = vsyncadd [#allocation4], %s1797
      %s1799 = sshll.u32 [#allocation5], 4
      %s1800 = int_to_ptr.vmem [resolvable:$true] %s1799
      %1805 = dma.vmem_to_hbm [thread:$0]  %s1800, 1024, %s8, [#allocation4], 512, 512, 32
    $region41: #{tpu_custom_call.1} parent=1 // pred_fallthru
      _
    // Predicated region
    $region42: #{tpu_custom_call.1} parent=1 // pred_check
      _
    $region43: #{tpu_custom_call.1} parent=1 // pred_check_branch
      %1807 = sbr.rel (0) target = $region45
    $region44: #{tpu_custom_call.1} parent=1 // pred_region
      %1808 = dma.done [#allocation4], 1024
    $region45: #{tpu_custom_call.1} parent=1 // pred_fallthru
      _
    %1809 = vsyncpa [#allocation3], 1
    %1810 = vsyncpa [#allocation4], 1

</llo_original>
